<compile_context>
chip_gen: v7x
topology: tpu7x:2x2x1
jax: 0.10.0
libtpu: 0.0.40
codegen_flags: <defaults>
</compile_context>

<pallas_src>
import jax
import jax.numpy as jnp
from jax import lax
from jax.experimental import pallas as pl
from jax.experimental.pallas import tpu as pltpu


def _round_up(x: int, m: int) -> int:
    return ((x + m - 1) // m) * m


def _pick_vmem_limit_bytes() -> int:
    """Leave headroom below physical VMEM: ~56 MiB on v7x, ~104 MiB on v5e/v6e."""
    try:
        cap = int(pltpu.get_tpu_info().vmem_capacity_bytes)
    except Exception:
        cap = 64 * 1024 * 1024  # conservative fallback (v7x per-TC)
    return min(max(cap - 8 * 1024 * 1024, 32 * 1024 * 1024), 104 * 1024 * 1024)


def _make_cross_attn_kernel(n_heads: int, d_k: int, inv_scale: float):
    def kernel(q_ref, k_ref, v_ref,
               wq_ref, bq_ref, wk_ref, bk_ref, wv_ref, bv_ref, wo_ref, bo_ref,
               o_ref,
               qp_ref, kp_ref, vp_ref, ctx_ref):
        # Per-step tiles: Q is (tq, D), K/V are (Skv, D).  Cast to bf16 on the
        # VPU here (inputs arrive in their natural dtype; no wrapper-side cast).
        q = q_ref[0].astype(jnp.bfloat16)
        k = k_ref[0].astype(jnp.bfloat16)
        v = v_ref[0].astype(jnp.bfloat16)

        # Full-D projections on the MXU (bf16 operands, f32 accumulation).
        # 1/sqrt(d_k) folded into the Q projection.  Results are parked in
        # VMEM scratch so the head loop re-reads small per-head slices instead
        # of keeping whole (S, D) values live in vregs.
        qp_ref[...] = ((jnp.dot(q, wq_ref[...], preferred_element_type=jnp.float32)
                        + bq_ref[...]) * inv_scale).astype(jnp.bfloat16)
        kp_ref[...] = (jnp.dot(k, wk_ref[...], preferred_element_type=jnp.float32)
                       + bk_ref[...]).astype(jnp.bfloat16)
        vp_ref[...] = (jnp.dot(v, wv_ref[...], preferred_element_type=jnp.float32)
                       + bv_ref[...]).astype(jnp.bfloat16)

        # Per-head scaled-dot-product attention.  n_heads is small and known at
        # trace time; static ref slices are zero-cost views, and each head's
        # scores/probs die at the ctx_ref store (bounded live ranges).
        for h in range(n_heads):
            lo = h * d_k
            qh = qp_ref[:, lo:lo + d_k]          # (tq,  d_k) bf16 (pre-scaled)
            kh = kp_ref[:, lo:lo + d_k]          # (Skv, d_k) bf16
            vh = vp_ref[:, lo:lo + d_k]          # (Skv, d_k) bf16

            # Contract last dims of both operands: no explicit K transpose.
            scores = lax.dot_general(
                qh, kh, (((1,), (1,)), ((), ())),
                preferred_element_type=jnp.float32)          # (tq, Skv) f32

            # Softmax (f32 math; approximate reciprocal on the EUP slot).
            m = jnp.max(scores, axis=-1, keepdims=True)
            p = jnp.exp(scores - m)
            denom = jnp.sum(p, axis=-1, keepdims=True)
            attn = (p * pl.reciprocal(denom, approx=True)).astype(jnp.bfloat16)

            ctx_ref[:, lo:lo + d_k] = jnp.dot(
                attn, vh, preferred_element_type=jnp.float32
            ).astype(jnp.bfloat16)

        # Output projection: one (tq, D) x (D, D) bf16 matmul, f32 accumulate.
        out = (jnp.dot(ctx_ref[...], wo_ref[...],
                       preferred_element_type=jnp.float32) + bo_ref[...])
        o_ref[0] = out.astype(o_ref.dtype)

    return kernel


def prepare_params(params):
    """One-time param prep: bf16 matmul weights, (1, D) f32 biases."""
    wq, bq, wk, bk, wv, bv, wo, bo = params
    D = wq.shape[0]
    w = lambda x: x.astype(jnp.bfloat16)
    b = lambda x: x.reshape(1, D).astype(jnp.float32)
    return (w(wq), b(bq), w(wk), b(bk), w(wv), b(bv), w(wo), b(bo))


def cross_attention_layer(Q, K, V, prepared_params, n_heads, *, tq_max=128):
    """Q: [B, Sq, D], K/V: [B, Skv, D]. Returns [B, Sq, D] (eval mode, no mask).

    `prepared_params` must come from prepare_params() (bf16 weights, f32 biases).
    """
    B, Sq, D = Q.shape
    _, Skv, _ = K.shape
    assert D % n_heads == 0, "d_model must be divisible by n_heads"
    d_k = D // n_heads
    inv_scale = 1.0 / float(jnp.sqrt(jnp.float32(d_k)))

    wq, bq, wk, bk, wv, bv, wo, bo = prepared_params

    # Query-sequence tiling (pad Sq to a multiple of tq so every block is full;
    # padded rows are independent under row-wise softmax and sliced off below).
    tq = min(tq_max, _round_up(Sq, 8))
    Sq_pad = _round_up(Sq, tq)
    if Sq_pad != Sq:
        Q = jnp.pad(Q, ((0, 0), (0, Sq_pad - Sq), (0, 0)))
    n_q_tiles = Sq_pad // tq

    kernel = _make_cross_attn_kernel(n_heads, d_k, inv_scale)

    q_spec = pl.BlockSpec((1, tq, D), lambda b, s: (b, s, 0))
    kv_spec = pl.BlockSpec((1, Skv, D), lambda b, s: (b, 0, 0))
    out_spec = pl.BlockSpec((1, tq, D), lambda b, s: (b, s, 0))
    # Grid-invariant weights/biases: single whole-array copy resident in VMEM
    # for the entire grid (no per-step double-buffered DMA).
    vmem_full = pl.BlockSpec(memory_space=pltpu.MemorySpace.VMEM)

    out = pl.pallas_call(
        kernel,
        out_shape=jax.ShapeDtypeStruct((B, Sq_pad, D), Q.dtype),
        grid_spec=pltpu.PrefetchScalarGridSpec(
            num_scalar_prefetch=0,
            grid=(B, n_q_tiles),
            in_specs=[
                q_spec,                  # Q
                kv_spec,                 # K
                kv_spec,                 # V
                vmem_full, vmem_full,    # W_q, b_q
                vmem_full, vmem_full,    # W_k, b_k
                vmem_full, vmem_full,    # W_v, b_v
                vmem_full, vmem_full,    # W_o, b_o
            ],
            out_specs=out_spec,
            scratch_shapes=[
                pltpu.VMEM((tq, D), jnp.bfloat16),    # qp (pre-scaled)
                pltpu.VMEM((Skv, D), jnp.bfloat16),   # kp
                pltpu.VMEM((Skv, D), jnp.bfloat16),   # vp
                pltpu.VMEM((tq, D), jnp.bfloat16),    # ctx
            ],
        ),
        compiler_params=pltpu.CompilerParams(
            dimension_semantics=("parallel", "parallel"),
            vmem_limit_bytes=_pick_vmem_limit_bytes()),
    )(Q, K, V, wq, bq, wk, bk, wv, bv, wo, bo)

    if Sq_pad != Sq:
        out = out[:, :Sq, :]
    return out


def init_params(key, d_model):
    """nn.Linear-style uniform ±1/sqrt(d_model); weights stored [d_in, d_out]."""
    bound = 1.0 / jnp.sqrt(jnp.float32(d_model))
    keys = jax.random.split(key, 8)

    def u(k, shape):
        return jax.random.uniform(k, shape, jnp.float32, -bound, bound)

    wq = u(keys[0], (d_model, d_model)); bq = u(keys[1], (d_model,))
    wk = u(keys[2], (d_model, d_model)); bk = u(keys[3], (d_model,))
    wv = u(keys[4], (d_model, d_model)); bv = u(keys[5], (d_model,))
    wo = u(keys[6], (d_model, d_model)); bo = u(keys[7], (d_model,))
    return (wq, bq, wk, bk, wv, bv, wo, bo)


def reference_cross_attention(Q, K, V, params, n_heads):
    """Pure-JAX f32 reference matching the PyTorch forward (eval mode, no mask)."""
    wq, bq, wk, bk, wv, bv, wo, bo = params
    B, Sq, D = Q.shape
    d_k = D // n_heads
    scale = jnp.sqrt(jnp.float32(d_k))

    Qp = (Q @ wq + bq).reshape(B, Sq, n_heads, d_k).transpose(0, 2, 1, 3)
    Kp = (K @ wk + bk).reshape(B, -1, n_heads, d_k).transpose(0, 2, 1, 3)
    Vp = (V @ wv + bv).reshape(B, -1, n_heads, d_k).transpose(0, 2, 1, 3)

    scores = jnp.einsum('bhqd,bhkd->bhqk', Qp, Kp) / scale
    attn = jax.nn.softmax(scores, axis=-1)
    ctx = jnp.einsum('bhqk,bhkd->bhqd', attn, Vp)
    ctx = ctx.transpose(0, 2, 1, 3).reshape(B, Sq, D)
    return ctx @ wo + bo


if __name__ == "__main__":
    B, Sq, Skv, D, H = 2, 8, 16, 32, 4

    key = jax.random.PRNGKey(0)
    kq, kk, kv, kp = jax.random.split(key, 4)
    Q = jax.random.normal(kq, (B, Sq, D), jnp.float32)
    K = jax.random.normal(kk, (B, Skv, D), jnp.float32)
    V = jax.random.normal(kv, (B, Skv, D), jnp.float32)
    params = init_params(kp, D)
    # One-time weight prep (bf16 weights, (1, D) f32 biases) — not per call.
    kparams = prepare_params(params)

    out = cross_attention_layer(Q, K, V, kparams, n_heads=H)
    out = jax.block_until_ready(out)

    ref = reference_cross_attention(Q, K, V, params, n_heads=H)
    assert out.shape == (B, Sq, D)
    max_err = jnp.max(jnp.abs(out - ref))
    # Tolerance vs. the f32 reference accounts for bf16 matmul operands and the
    # approximate (EUP) reciprocal in the softmax denominator.
    assert jnp.allclose(out, ref, atol=5e-2, rtol=5e-2), \
        f"max abs err = {max_err}"

    print("KERNEL_OK")
</pallas_src>

<mosaic_0001>
module attributes {stable_mosaic.version = 11 : i64} {
  func.func @kernel(%arg0: i32, %arg1: i32, %arg2: memref<1x8x32xf32, #tpu.memory_space<vmem>>, %arg3: memref<1x16x32xf32, #tpu.memory_space<vmem>>, %arg4: memref<1x16x32xf32, #tpu.memory_space<vmem>>, %arg5: memref<32x32xbf16, #tpu.memory_space<vmem>>, %arg6: memref<1x32xf32, #tpu.memory_space<vmem>>, %arg7: memref<32x32xbf16, #tpu.memory_space<vmem>>, %arg8: memref<1x32xf32, #tpu.memory_space<vmem>>, %arg9: memref<32x32xbf16, #tpu.memory_space<vmem>>, %arg10: memref<1x32xf32, #tpu.memory_space<vmem>>, %arg11: memref<32x32xbf16, #tpu.memory_space<vmem>>, %arg12: memref<1x32xf32, #tpu.memory_space<vmem>>, %arg13: memref<1x8x32xf32, #tpu.memory_space<vmem>>, %arg14: memref<8x32xbf16, #tpu.memory_space<vmem>>, %arg15: memref<16x32xbf16, #tpu.memory_space<vmem>>, %arg16: memref<16x32xbf16, #tpu.memory_space<vmem>>, %arg17: memref<8x32xbf16, #tpu.memory_space<vmem>>) attributes {dimension_semantics = [#tpu.dimension_semantics<parallel>, #tpu.dimension_semantics<parallel>], iteration_bounds = array<i64: 2, 1>, scalar_prefetch = 0 : i64, scratch_operands = 4 : i64, tpu.core_type = #tpu.core_type<tc>, window_params = [{transform_indices = @transform_0, window_bounds = array<i64: 1, 8, 32>}, {transform_indices = @transform_1, window_bounds = array<i64: 1, 16, 32>}, {transform_indices = @transform_2, window_bounds = array<i64: 1, 16, 32>}, {pipeline_mode = #tpu.pipeline_mode<synchronous>, transform_indices = @transform_3, window_bounds = array<i64: 32, 32>}, {pipeline_mode = #tpu.pipeline_mode<synchronous>, transform_indices = @transform_4, window_bounds = array<i64: 1, 32>}, {pipeline_mode = #tpu.pipeline_mode<synchronous>, transform_indices = @transform_5, window_bounds = array<i64: 32, 32>}, {pipeline_mode = #tpu.pipeline_mode<synchronous>, transform_indices = @transform_6, window_bounds = array<i64: 1, 32>}, {pipeline_mode = #tpu.pipeline_mode<synchronous>, transform_indices = @transform_7, window_bounds = array<i64: 32, 32>}, {pipeline_mode = #tpu.pipeline_mode<synchronous>, transform_indices = @transform_8, window_bounds = array<i64: 1, 32>}, {pipeline_mode = #tpu.pipeline_mode<synchronous>, transform_indices = @transform_9, window_bounds = array<i64: 32, 32>}, {pipeline_mode = #tpu.pipeline_mode<synchronous>, transform_indices = @transform_10, window_bounds = array<i64: 1, 32>}, {transform_indices = @transform_11, window_bounds = array<i64: 1, 8, 32>}]} {
    %c0 = arith.constant 0 : index
    %c0_0 = arith.constant 0 : index
    %c0_1 = arith.constant 0 : index
    %0 = vector.load %arg2[%c0, %c0_0, %c0_1] : memref<1x8x32xf32, #tpu.memory_space<vmem>>, vector<1x8x32xf32>
    %1 = vector.shape_cast %0 : vector<1x8x32xf32> to vector<8x32xf32>
    %2 = arith.truncf %1 : vector<8x32xf32> to vector<8x32xbf16>
    %c0_2 = arith.constant 0 : index
    %c0_3 = arith.constant 0 : index
    %c0_4 = arith.constant 0 : index
    %3 = vector.load %arg3[%c0_2, %c0_3, %c0_4] : memref<1x16x32xf32, #tpu.memory_space<vmem>>, vector<1x16x32xf32>
    %4 = vector.shape_cast %3 : vector<1x16x32xf32> to vector<16x32xf32>
    %5 = arith.truncf %4 : vector<16x32xf32> to vector<16x32xbf16>
    %c0_5 = arith.constant 0 : index
    %c0_6 = arith.constant 0 : index
    %c0_7 = arith.constant 0 : index
    %6 = vector.load %arg4[%c0_5, %c0_6, %c0_7] : memref<1x16x32xf32, #tpu.memory_space<vmem>>, vector<1x16x32xf32>
    %7 = vector.shape_cast %6 : vector<1x16x32xf32> to vector<16x32xf32>
    %8 = arith.truncf %7 : vector<16x32xf32> to vector<16x32xbf16>
    %c0_8 = arith.constant 0 : index
    %c0_9 = arith.constant 0 : index
    %9 = vector.load %arg5[%c0_8, %c0_9] : memref<32x32xbf16, #tpu.memory_space<vmem>>, vector<32x32xbf16>
    %cst = arith.constant dense<0.000000e+00> : vector<8x32xf32>
    %10 = tpu.matmul %2, %9, %cst {dimension_numbers = #tpu.dot_dimension_numbers<[1], [0], [0], [1], [0, 0, 1, 1], [], []>} : vector<8x32xbf16>, vector<32x32xbf16>, vector<8x32xf32> -> vector<8x32xf32>
    %c0_10 = arith.constant 0 : index
    %c0_11 = arith.constant 0 : index
    %11 = vector.load %arg6[%c0_10, %c0_11] : memref<1x32xf32, #tpu.memory_space<vmem>>, vector<1x32xf32>
    %12 = vector.broadcast %11 : vector<1x32xf32> to vector<8x32xf32>
    %13 = arith.addf %10, %12 : vector<8x32xf32>
    %cst_12 = arith.constant 0.353553385 : f32
    %14 = vector.broadcast %cst_12 : f32 to vector<8x32xf32>
    %15 = arith.mulf %13, %14 : vector<8x32xf32>
    %16 = arith.truncf %15 : vector<8x32xf32> to vector<8x32xbf16>
    %c0_13 = arith.constant 0 : index
    %c0_14 = arith.constant 0 : index
    %17 = vector.load %arg14[%c0_13, %c0_14] : memref<8x32xbf16, #tpu.memory_space<vmem>>, vector<8x32xbf16>
    tpu.vector_store %arg14[%c0_13, %c0_14], %16 {strides = array<i32>} : memref<8x32xbf16, #tpu.memory_space<vmem>>, vector<8x32xbf16>,
    %c0_15 = arith.constant 0 : index
    %c0_16 = arith.constant 0 : index
    %18 = vector.load %arg7[%c0_15, %c0_16] : memref<32x32xbf16, #tpu.memory_space<vmem>>, vector<32x32xbf16>
    %cst_17 = arith.constant dense<0.000000e+00> : vector<16x32xf32>
    %19 = tpu.matmul %5, %18, %cst_17 {dimension_numbers = #tpu.dot_dimension_numbers<[1], [0], [0], [1], [0, 0, 1, 1], [], []>} : vector<16x32xbf16>, vector<32x32xbf16>, vector<16x32xf32> -> vector<16x32xf32>
    %c0_18 = arith.constant 0 : index
    %c0_19 = arith.constant 0 : index
    %20 = vector.load %arg8[%c0_18, %c0_19] : memref<1x32xf32, #tpu.memory_space<vmem>>, vector<1x32xf32>
    %21 = vector.broadcast %20 : vector<1x32xf32> to vector<16x32xf32>
    %22 = arith.addf %19, %21 : vector<16x32xf32>
    %23 = arith.truncf %22 : vector<16x32xf32> to vector<16x32xbf16>
    %c0_20 = arith.constant 0 : index
    %c0_21 = arith.constant 0 : index
    %24 = vector.load %arg15[%c0_20, %c0_21] : memref<16x32xbf16, #tpu.memory_space<vmem>>, vector<16x32xbf16>
    tpu.vector_store %arg15[%c0_20, %c0_21], %23 {strides = array<i32>} : memref<16x32xbf16, #tpu.memory_space<vmem>>, vector<16x32xbf16>,
    %c0_22 = arith.constant 0 : index
    %c0_23 = arith.constant 0 : index
    %25 = vector.load %arg9[%c0_22, %c0_23] : memref<32x32xbf16, #tpu.memory_space<vmem>>, vector<32x32xbf16>
    %cst_24 = arith.constant dense<0.000000e+00> : vector<16x32xf32>
    %26 = tpu.matmul %8, %25, %cst_24 {dimension_numbers = #tpu.dot_dimension_numbers<[1], [0], [0], [1], [0, 0, 1, 1], [], []>} : vector<16x32xbf16>, vector<32x32xbf16>, vector<16x32xf32> -> vector<16x32xf32>
    %c0_25 = arith.constant 0 : index
    %c0_26 = arith.constant 0 : index
    %27 = vector.load %arg10[%c0_25, %c0_26] : memref<1x32xf32, #tpu.memory_space<vmem>>, vector<1x32xf32>
    %28 = vector.broadcast %27 : vector<1x32xf32> to vector<16x32xf32>
    %29 = arith.addf %26, %28 : vector<16x32xf32>
    %30 = arith.truncf %29 : vector<16x32xf32> to vector<16x32xbf16>
    %c0_27 = arith.constant 0 : index
    %c0_28 = arith.constant 0 : index
    %31 = vector.load %arg16[%c0_27, %c0_28] : memref<16x32xbf16, #tpu.memory_space<vmem>>, vector<16x32xbf16>
    tpu.vector_store %arg16[%c0_27, %c0_28], %30 {strides = array<i32>} : memref<16x32xbf16, #tpu.memory_space<vmem>>, vector<16x32xbf16>,
    %c0_29 = arith.constant 0 : index
    %c0_30 = arith.constant 0 : index
    %32 = vector.load %arg14[%c0_29, %c0_30] : memref<8x32xbf16, #tpu.memory_space<vmem>>, vector<8x8xbf16>
    %c0_31 = arith.constant 0 : index
    %c0_32 = arith.constant 0 : index
    %33 = vector.load %arg15[%c0_31, %c0_32] : memref<16x32xbf16, #tpu.memory_space<vmem>>, vector<16x8xbf16>
    %c0_33 = arith.constant 0 : index
    %c0_34 = arith.constant 0 : index
    %34 = vector.load %arg16[%c0_33, %c0_34] : memref<16x32xbf16, #tpu.memory_space<vmem>>, vector<16x8xbf16>
    %cst_35 = arith.constant dense<0.000000e+00> : vector<8x16xf32>
    %35 = tpu.matmul %32, %33, %cst_35 {dimension_numbers = #tpu.dot_dimension_numbers<[1], [1], [0], [0], [0, 0, 1, 0], [], []>} : vector<8x8xbf16>, vector<16x8xbf16>, vector<8x16xf32> -> vector<8x16xf32>
    %cst_36 = arith.constant dense<0xFF800000> : vector<8xf32>
    %36 = vector.multi_reduction <maximumf>, %35, %cst_36 [1] : vector<8x16xf32> to vector<8xf32>
    %37 = vector.shape_cast %36 : vector<8xf32> to vector<8x1xf32>
    %38 = vector.broadcast %37 : vector<8x1xf32> to vector<8x16xf32>
    %39 = arith.subf %35, %38 : vector<8x16xf32>
    %40 = math.exp %39 : vector<8x16xf32>
    %cst_37 = arith.constant dense<0.000000e+00> : vector<8xf32>
    %41 = vector.multi_reduction <add>, %40, %cst_37 [1] : vector<8x16xf32> to vector<8xf32>
    %42 = vector.shape_cast %41 : vector<8xf32> to vector<8x1xf32>
    %43 = tpu.reciprocal %42 {approx = true} : vector<8x1xf32> -> vector<8x1xf32>
    %44 = vector.broadcast %43 : vector<8x1xf32> to vector<8x16xf32>
    %45 = arith.mulf %40, %44 : vector<8x16xf32>
    %46 = arith.truncf %45 : vector<8x16xf32> to vector<8x16xbf16>
    %cst_38 = arith.constant dense<0.000000e+00> : vector<8x8xf32>
    %47 = tpu.matmul %46, %34, %cst_38 {dimension_numbers = #tpu.dot_dimension_numbers<[1], [0], [0], [1], [0, 0, 1, 1], [], []>} : vector<8x16xbf16>, vector<16x8xbf16>, vector<8x8xf32> -> vector<8x8xf32>
    %48 = arith.truncf %47 : vector<8x8xf32> to vector<8x8xbf16>
    %c0_39 = arith.constant 0 : index
    %c0_40 = arith.constant 0 : index
    %49 = vector.load %arg17[%c0_39, %c0_40] : memref<8x32xbf16, #tpu.memory_space<vmem>>, vector<8x8xbf16>
    tpu.vector_store %arg17[%c0_39, %c0_40], %48 {strides = array<i32>} : memref<8x32xbf16, #tpu.memory_space<vmem>>, vector<8x8xbf16>,
    %c0_41 = arith.constant 0 : index
    %c8 = arith.constant 8 : index
    %50 = vector.load %arg14[%c0_41, %c8] : memref<8x32xbf16, #tpu.memory_space<vmem>>, vector<8x8xbf16>
    %c0_42 = arith.constant 0 : index
    %c8_43 = arith.constant 8 : index
    %51 = vector.load %arg15[%c0_42, %c8_43] : memref<16x32xbf16, #tpu.memory_space<vmem>>, vector<16x8xbf16>
    %c0_44 = arith.constant 0 : index
    %c8_45 = arith.constant 8 : index
    %52 = vector.load %arg16[%c0_44, %c8_45] : memref<16x32xbf16, #tpu.memory_space<vmem>>, vector<16x8xbf16>
    %cst_46 = arith.constant dense<0.000000e+00> : vector<8x16xf32>
    %53 = tpu.matmul %50, %51, %cst_46 {dimension_numbers = #tpu.dot_dimension_numbers<[1], [1], [0], [0], [0, 0, 1, 0], [], []>} : vector<8x8xbf16>, vector<16x8xbf16>, vector<8x16xf32> -> vector<8x16xf32>
    %cst_47 = arith.constant dense<0xFF800000> : vector<8xf32>
    %54 = vector.multi_reduction <maximumf>, %53, %cst_47 [1] : vector<8x16xf32> to vector<8xf32>
    %55 = vector.shape_cast %54 : vector<8xf32> to vector<8x1xf32>
    %56 = vector.broadcast %55 : vector<8x1xf32> to vector<8x16xf32>
    %57 = arith.subf %53, %56 : vector<8x16xf32>
    %58 = math.exp %57 : vector<8x16xf32>
    %cst_48 = arith.constant dense<0.000000e+00> : vector<8xf32>
    %59 = vector.multi_reduction <add>, %58, %cst_48 [1] : vector<8x16xf32> to vector<8xf32>
    %60 = vector.shape_cast %59 : vector<8xf32> to vector<8x1xf32>
    %61 = tpu.reciprocal %60 {approx = true} : vector<8x1xf32> -> vector<8x1xf32>
    %62 = vector.broadcast %61 : vector<8x1xf32> to vector<8x16xf32>
    %63 = arith.mulf %58, %62 : vector<8x16xf32>
    %64 = arith.truncf %63 : vector<8x16xf32> to vector<8x16xbf16>
    %cst_49 = arith.constant dense<0.000000e+00> : vector<8x8xf32>
    %65 = tpu.matmul %64, %52, %cst_49 {dimension_numbers = #tpu.dot_dimension_numbers<[1], [0], [0], [1], [0, 0, 1, 1], [], []>} : vector<8x16xbf16>, vector<16x8xbf16>, vector<8x8xf32> -> vector<8x8xf32>
    %66 = arith.truncf %65 : vector<8x8xf32> to vector<8x8xbf16>
    %c0_50 = arith.constant 0 : index
    %c8_51 = arith.constant 8 : index
    %67 = vector.load %arg17[%c0_50, %c8_51] : memref<8x32xbf16, #tpu.memory_space<vmem>>, vector<8x8xbf16>
    tpu.vector_store %arg17[%c0_50, %c8_51], %66 {strides = array<i32>} : memref<8x32xbf16, #tpu.memory_space<vmem>>, vector<8x8xbf16>,
    %c0_52 = arith.constant 0 : index
    %c16 = arith.constant 16 : index
    %68 = vector.load %arg14[%c0_52, %c16] : memref<8x32xbf16, #tpu.memory_space<vmem>>, vector<8x8xbf16>
    %c0_53 = arith.constant 0 : index
    %c16_54 = arith.constant 16 : index
    %69 = vector.load %arg15[%c0_53, %c16_54] : memref<16x32xbf16, #tpu.memory_space<vmem>>, vector<16x8xbf16>
    %c0_55 = arith.constant 0 : index
    %c16_56 = arith.constant 16 : index
    %70 = vector.load %arg16[%c0_55, %c16_56] : memref<16x32xbf16, #tpu.memory_space<vmem>>, vector<16x8xbf16>
    %cst_57 = arith.constant dense<0.000000e+00> : vector<8x16xf32>
    %71 = tpu.matmul %68, %69, %cst_57 {dimension_numbers = #tpu.dot_dimension_numbers<[1], [1], [0], [0], [0, 0, 1, 0], [], []>} : vector<8x8xbf16>, vector<16x8xbf16>, vector<8x16xf32> -> vector<8x16xf32>
    %cst_58 = arith.constant dense<0xFF800000> : vector<8xf32>
    %72 = vector.multi_reduction <maximumf>, %71, %cst_58 [1] : vector<8x16xf32> to vector<8xf32>
    %73 = vector.shape_cast %72 : vector<8xf32> to vector<8x1xf32>
    %74 = vector.broadcast %73 : vector<8x1xf32> to vector<8x16xf32>
    %75 = arith.subf %71, %74 : vector<8x16xf32>
    %76 = math.exp %75 : vector<8x16xf32>
    %cst_59 = arith.constant dense<0.000000e+00> : vector<8xf32>
    %77 = vector.multi_reduction <add>, %76, %cst_59 [1] : vector<8x16xf32> to vector<8xf32>
    %78 = vector.shape_cast %77 : vector<8xf32> to vector<8x1xf32>
    %79 = tpu.reciprocal %78 {approx = true} : vector<8x1xf32> -> vector<8x1xf32>
    %80 = vector.broadcast %79 : vector<8x1xf32> to vector<8x16xf32>
    %81 = arith.mulf %76, %80 : vector<8x16xf32>
    %82 = arith.truncf %81 : vector<8x16xf32> to vector<8x16xbf16>
    %cst_60 = arith.constant dense<0.000000e+00> : vector<8x8xf32>
    %83 = tpu.matmul %82, %70, %cst_60 {dimension_numbers = #tpu.dot_dimension_numbers<[1], [0], [0], [1], [0, 0, 1, 1], [], []>} : vector<8x16xbf16>, vector<16x8xbf16>, vector<8x8xf32> -> vector<8x8xf32>
    %84 = arith.truncf %83 : vector<8x8xf32> to vector<8x8xbf16>
    %c0_61 = arith.constant 0 : index
    %c16_62 = arith.constant 16 : index
    %85 = vector.load %arg17[%c0_61, %c16_62] : memref<8x32xbf16, #tpu.memory_space<vmem>>, vector<8x8xbf16>
    tpu.vector_store %arg17[%c0_61, %c16_62], %84 {strides = array<i32>} : memref<8x32xbf16, #tpu.memory_space<vmem>>, vector<8x8xbf16>,
    %c0_63 = arith.constant 0 : index
    %c24 = arith.constant 24 : index
    %86 = vector.load %arg14[%c0_63, %c24] : memref<8x32xbf16, #tpu.memory_space<vmem>>, vector<8x8xbf16>
    %c0_64 = arith.constant 0 : index
    %c24_65 = arith.constant 24 : index
    %87 = vector.load %arg15[%c0_64, %c24_65] : memref<16x32xbf16, #tpu.memory_space<vmem>>, vector<16x8xbf16>
    %c0_66 = arith.constant 0 : index
    %c24_67 = arith.constant 24 : index
    %88 = vector.load %arg16[%c0_66, %c24_67] : memref<16x32xbf16, #tpu.memory_space<vmem>>, vector<16x8xbf16>
    %cst_68 = arith.constant dense<0.000000e+00> : vector<8x16xf32>
    %89 = tpu.matmul %86, %87, %cst_68 {dimension_numbers = #tpu.dot_dimension_numbers<[1], [1], [0], [0], [0, 0, 1, 0], [], []>} : vector<8x8xbf16>, vector<16x8xbf16>, vector<8x16xf32> -> vector<8x16xf32>
    %cst_69 = arith.constant dense<0xFF800000> : vector<8xf32>
    %90 = vector.multi_reduction <maximumf>, %89, %cst_69 [1] : vector<8x16xf32> to vector<8xf32>
    %91 = vector.shape_cast %90 : vector<8xf32> to vector<8x1xf32>
    %92 = vector.broadcast %91 : vector<8x1xf32> to vector<8x16xf32>
    %93 = arith.subf %89, %92 : vector<8x16xf32>
    %94 = math.exp %93 : vector<8x16xf32>
    %cst_70 = arith.constant dense<0.000000e+00> : vector<8xf32>
    %95 = vector.multi_reduction <add>, %94, %cst_70 [1] : vector<8x16xf32> to vector<8xf32>
    %96 = vector.shape_cast %95 : vector<8xf32> to vector<8x1xf32>
    %97 = tpu.reciprocal %96 {approx = true} : vector<8x1xf32> -> vector<8x1xf32>
    %98 = vector.broadcast %97 : vector<8x1xf32> to vector<8x16xf32>
    %99 = arith.mulf %94, %98 : vector<8x16xf32>
    %100 = arith.truncf %99 : vector<8x16xf32> to vector<8x16xbf16>
    %cst_71 = arith.constant dense<0.000000e+00> : vector<8x8xf32>
    %101 = tpu.matmul %100, %88, %cst_71 {dimension_numbers = #tpu.dot_dimension_numbers<[1], [0], [0], [1], [0, 0, 1, 1], [], []>} : vector<8x16xbf16>, vector<16x8xbf16>, vector<8x8xf32> -> vector<8x8xf32>
    %102 = arith.truncf %101 : vector<8x8xf32> to vector<8x8xbf16>
    %c0_72 = arith.constant 0 : index
    %c24_73 = arith.constant 24 : index
    %103 = vector.load %arg17[%c0_72, %c24_73] : memref<8x32xbf16, #tpu.memory_space<vmem>>, vector<8x8xbf16>
    tpu.vector_store %arg17[%c0_72, %c24_73], %102 {strides = array<i32>} : memref<8x32xbf16, #tpu.memory_space<vmem>>, vector<8x8xbf16>,
    %c0_74 = arith.constant 0 : index
    %c0_75 = arith.constant 0 : index
    %104 = vector.load %arg17[%c0_74, %c0_75] : memref<8x32xbf16, #tpu.memory_space<vmem>>, vector<8x32xbf16>
    %c0_76 = arith.constant 0 : index
    %c0_77 = arith.constant 0 : index
    %105 = vector.load %arg11[%c0_76, %c0_77] : memref<32x32xbf16, #tpu.memory_space<vmem>>, vector<32x32xbf16>
    %cst_78 = arith.constant dense<0.000000e+00> : vector<8x32xf32>
    %106 = tpu.matmul %104, %105, %cst_78 {dimension_numbers = #tpu.dot_dimension_numbers<[1], [0], [0], [1], [0, 0, 1, 1], [], []>} : vector<8x32xbf16>, vector<32x32xbf16>, vector<8x32xf32> -> vector<8x32xf32>
    %c0_79 = arith.constant 0 : index
    %c0_80 = arith.constant 0 : index
    %107 = vector.load %arg12[%c0_79, %c0_80] : memref<1x32xf32, #tpu.memory_space<vmem>>, vector<1x32xf32>
    %108 = vector.broadcast %107 : vector<1x32xf32> to vector<8x32xf32>
    %109 = arith.addf %106, %108 : vector<8x32xf32>
    %c0_81 = arith.constant 0 : index
    %c0_82 = arith.constant 0 : index
    %c0_83 = arith.constant 0 : index
    %110 = vector.load %arg13[%c0_81, %c0_82, %c0_83] : memref<1x8x32xf32, #tpu.memory_space<vmem>>, vector<1x8x32xf32>
    %111 = vector.shape_cast %110 : vector<1x8x32xf32> to vector<8x32xf32>
    %112 = vector.shape_cast %109 : vector<8x32xf32> to vector<1x8x32xf32>
    tpu.vector_store %arg13[%c0_81, %c0_82, %c0_83], %112 {strides = array<i32>} : memref<1x8x32xf32, #tpu.memory_space<vmem>>, vector<1x8x32xf32>,
    return
  }
  func.func @transform_0(%arg0: i32, %arg1: i32) -> (i32, i32, i32) {
    %c0_i32 = arith.constant 0 : i32
    %c0_i32_0 = arith.constant 0 : i32
    return %arg0, %arg1, %c0_i32 : i32, i32, i32
  }
  func.func @transform_1(%arg0: i32, %arg1: i32) -> (i32, i32, i32) {
    %c0_i32 = arith.constant 0 : i32
    %c0_i32_0 = arith.constant 0 : i32
    %c0_i32_1 = arith.constant 0 : i32
    return %arg0, %c0_i32, %c0_i32_0 : i32, i32, i32
  }
  func.func @transform_2(%arg0: i32, %arg1: i32) -> (i32, i32, i32) {
    %c0_i32 = arith.constant 0 : i32
    %c0_i32_0 = arith.constant 0 : i32
    %c0_i32_1 = arith.constant 0 : i32
    return %arg0, %c0_i32, %c0_i32_0 : i32, i32, i32
  }
  func.func @transform_3(%arg0: i32, %arg1: i32) -> (i32, i32) {
    %c0_i32 = arith.constant 0 : i32
    %c0_i32_0 = arith.constant 0 : i32
    %c0_i32_1 = arith.constant 0 : i32
    return %c0_i32, %c0_i32_0 : i32, i32
  }
  func.func @transform_4(%arg0: i32, %arg1: i32) -> (i32, i32) {
    %c0_i32 = arith.constant 0 : i32
    %c0_i32_0 = arith.constant 0 : i32
    %c0_i32_1 = arith.constant 0 : i32
    return %c0_i32, %c0_i32_0 : i32, i32
  }
  func.func @transform_5(%arg0: i32, %arg1: i32) -> (i32, i32) {
    %c0_i32 = arith.constant 0 : i32
    %c0_i32_0 = arith.constant 0 : i32
    %c0_i32_1 = arith.constant 0 : i32
    return %c0_i32, %c0_i32_0 : i32, i32
  }
  func.func @transform_6(%arg0: i32, %arg1: i32) -> (i32, i32) {
    %c0_i32 = arith.constant 0 : i32
    %c0_i32_0 = arith.constant 0 : i32
    %c0_i32_1 = arith.constant 0 : i32
    return %c0_i32, %c0_i32_0 : i32, i32
  }
  func.func @transform_7(%arg0: i32, %arg1: i32) -> (i32, i32) {
    %c0_i32 = arith.constant 0 : i32
    %c0_i32_0 = arith.constant 0 : i32
    %c0_i32_1 = arith.constant 0 : i32
    return %c0_i32, %c0_i32_0 : i32, i32
  }
  func.func @transform_8(%arg0: i32, %arg1: i32) -> (i32, i32) {
    %c0_i32 = arith.constant 0 : i32
    %c0_i32_0 = arith.constant 0 : i32
    %c0_i32_1 = arith.constant 0 : i32
    return %c0_i32, %c0_i32_0 : i32, i32
  }
  func.func @transform_9(%arg0: i32, %arg1: i32) -> (i32, i32) {
    %c0_i32 = arith.constant 0 : i32
    %c0_i32_0 = arith.constant 0 : i32
    %c0_i32_1 = arith.constant 0 : i32
    return %c0_i32, %c0_i32_0 : i32, i32
  }
  func.func @transform_10(%arg0: i32, %arg1: i32) -> (i32, i32) {
    %c0_i32 = arith.constant 0 : i32
    %c0_i32_0 = arith.constant 0 : i32
    %c0_i32_1 = arith.constant 0 : i32
    return %c0_i32, %c0_i32_0 : i32, i32
  }
  func.func @transform_11(%arg0: i32, %arg1: i32) -> (i32, i32, i32) {
    %c0_i32 = arith.constant 0 : i32
    %c0_i32_0 = arith.constant 0 : i32
    return %arg0, %arg1, %c0_i32 : i32, i32, i32
  }
}

</mosaic_0001>

<llo_original>
// kernel: tpu_custom_call.1
$region0: #{tpu_custom_call.1}
  #allocation0 [shape = 'u32[]', space=smem, size = 0x4, offset = 0x4, fixed_abs, tag = 'smem constant byte address 0x4 - core index']
  #allocation1 [shape = 'u32[144,128]{1,0:T(1,128)}', space=vmem, size = 0x12000, scoped, tag = 'internal scratch']
  #allocation2 [shape = 'bf16[8,32]{1,0:T(8,128)(2,1)}', space=vmem, size = 0x800, scoped, tag = 'scratch operand']
  #allocation3 [shape = 'bf16[16,32]{1,0:T(16,128)(2,1)}', space=vmem, size = 0x1000, scoped, tag = 'scratch operand']
  #allocation4 [shape = 'bf16[16,32]{1,0:T(16,128)(2,1)}', space=vmem, size = 0x1000, scoped, tag = 'scratch operand']
  #allocation5 [shape = 'bf16[8,32]{1,0:T(8,128)(2,1)}', space=vmem, size = 0x800, scoped, tag = 'scratch operand']
  %s0 = inlined_call_operand.hbm [shape: f32[2,8,32], index: 0, kind: input, shape index: {}]
  %s1 = inlined_call_operand.hbm [shape: f32[2,16,32], index: 1, kind: input, shape index: {}]
  %s2 = inlined_call_operand.hbm [shape: f32[2,16,32], index: 2, kind: input, shape index: {}]
  %s3 = inlined_call_operand.hbm [shape: bf16[32,32], index: 3, kind: input, shape index: {}]
  %s4 = inlined_call_operand.vmem [shape: f32[1,32], index: 4, kind: input, shape index: {}]
  %s5 = inlined_call_operand.vmem [shape: bf16[32,32], index: 5, kind: input, shape index: {}]
  %s6 = inlined_call_operand.vmem [shape: f32[1,32], index: 6, kind: input, shape index: {}]
  %s7 = inlined_call_operand.hbm [shape: bf16[32,32], index: 7, kind: input, shape index: {}]
  %s8 = inlined_call_operand.hbm [shape: f32[1,32], index: 8, kind: input, shape index: {}]
  %s9 = inlined_call_operand.vmem [shape: bf16[32,32], index: 9, kind: input, shape index: {}]
  %s10 = inlined_call_operand.vmem [shape: f32[1,32], index: 10, kind: input, shape index: {}]
  %s11 = inlined_call_operand.hbm [shape: f32[2,8,32], index: 11, kind: output, shape index: {}]
  %s12 = sld [smem:[#allocation0]]
  $region101: #{tpu_custom_call.1} parent=0
    _
  %s14 = ssub.s32 1, %s12
  %s15 = scalar_select 0, %s14, %s12
  $region1: #{tpu_custom_call.1} parent=0
    #allocation6 [shape = 'u8[8192]{0}', space=vmem, size = 0x2000, scoped, tag = 'input window, operand 0']
    #allocation7 [shape = 's32[2]{0}', space=sflag, size = 0x8, scoped, tag = 'scoped memory for tpu_custom_call.1']
    #allocation8 [shape = 's32[2]{0}', space=sflag, size = 0x8, scoped, tag = 'scoped memory for tpu_custom_call.1']
    #allocation9 [shape = 'u8[16384]{0}', space=vmem, size = 0x4000, scoped, tag = 'input window, operand 1']
    #allocation10 [shape = 's32[2]{0}', space=sflag, size = 0x8, scoped, tag = 'scoped memory for tpu_custom_call.1']
    #allocation11 [shape = 'u8[16384]{0}', space=vmem, size = 0x4000, scoped, tag = 'input window, operand 2']
    #allocation12 [shape = 'u8[8192]{0}', space=vmem, size = 0x2000, scoped, tag = 'input window, operand 3, single buffered']
    #allocation13 [shape = 's32[1]{0}', space=sflag, size = 0x4, scoped, tag = 'scoped memory for tpu_custom_call.1']
    #allocation14 [shape = 'u8[8192]{0}', space=vmem, size = 0x2000, scoped, tag = 'input window, operand 7, single buffered']
    #allocation15 [shape = 'u8[512]{0}', space=vmem, size = 0x400, scoped, tag = 'input window, operand 8, single buffered']
    #allocation16 [shape = 's32[1]{0}', space=sflag, size = 0x4, scoped, tag = 'scoped memory for tpu_custom_call.1']
    #allocation17 [shape = 'u8[8192]{0}', space=vmem, size = 0x2000, scoped, tag = 'output window, operand 0']
    %16 = vsyncpa [#allocation7], 0
    %s17 = scalar_lea.sflag [#allocation7], 1
    %18 = vsyncpa %s17, 0
    %19 = vsyncpa [#allocation10], 0
    %s20 = scalar_lea.sflag [#allocation10], 1
    %21 = vsyncpa %s20, 0
    %22 = vsyncpa [#allocation13], 0
    %23 = vsyncpa [#allocation16], 0
    %24 = vsyncpa [#allocation8], 0
    %s25 = scalar_lea.sflag [#allocation8], 1
    %26 = vsyncpa %s25, 0
    loop: start=0, step=1, limit=4
    $region2: #{tpu_custom_call.1} parent=1 // loop_pre_header
      _
    $region3: #{tpu_custom_call.1} parent=1 // loop_header
      %s28 = sphi 0, %s32
      %p29 = scmp.ge.s32.totalorder %s28, 4
      %s35 = sphi 0, %s47
      %s36 = sphi 0, %s43
      %s37 = sphi 0, %s35
      %s38 = sphi 0, %s36
      %s39 = sphi 0, %s37
      %s40 = sphi 0, %s38
      %s52 = sphi 0, %s54
      %s55 = sphi 0, %s52
      %s56 = sphi 0, %s55
      %s72 = sphi 0, %s56
      %s78 = sphi 0, %s80
      %s81 = sphi 0, %s78
      %s82 = sphi 0, %s81
      %s98 = sphi 0, %s82
      %s104 = sphi 0, %s106
      %s107 = sphi 0, %s104
      %s108 = sphi 0, %s107
      %s124 = sphi 0, %s108
      %s128 = sphi 0, %s128
      %s130 = sphi 0, %s128
      %s131 = sphi 0, %s130
      %s145 = sphi 0, %s131
      %s149 = sphi 0, %s149
      %s151 = sphi 0, %s149
      %s152 = sphi 0, %s151
      %s166 = sphi 0, %s152
      %s170 = sphi 0, %s170
      %s172 = sphi 0, %s170
      %s173 = sphi 0, %s172
      %s187 = sphi 0, %s173
      %s191 = sphi 0, %s191
      %s193 = sphi 0, %s191
      %s194 = sphi 0, %s193
      %s208 = sphi 0, %s194
      %s212 = sphi 0, %s212
      %s214 = sphi 0, %s212
      %s215 = sphi 0, %s214
      %s229 = sphi 0, %s215
      %s233 = sphi 0, %s233
      %s235 = sphi 0, %s233
      %s236 = sphi 0, %s235
      %s250 = sphi 0, %s236
      %s254 = sphi 0, %s254
      %s256 = sphi 0, %s254
      %s257 = sphi 0, %s256
      %s271 = sphi 0, %s257
      %s275 = sphi 0, %s275
      %s277 = sphi 0, %s275
      %s278 = sphi 0, %s277
      %s292 = sphi 0, %s278
      %s300 = sphi 0, %s302
      %s303 = sphi 0, %s300
      %s304 = sphi 0, %s303
      %s320 = sphi 0, %s304
    $region4: #{tpu_custom_call.1} parent=1 // loop_header_branch
      %31 = sbr.rel (%p29) target = $region8
    $region5: #{tpu_custom_call.1} parent=1 // loop_body
      %s33 = ssub.s32 %s28, 1
      %s34 = ssub.s32 %s28, 2
      %s41 = sadd.s32 1, %s36
      %p42 = scmp.ge.s32.totalorder %s41, 1
      %s43 = scalar_select %p42, 0, %s41
      %s44 = sadd.s32 1, %s35
      %s45 = scalar_select %p42, %s44, %s35
      %p46 = scmp.ge.s32.totalorder %s45, 2
      %s47 = scalar_select %p46, 0, %s45
      %s48 = ssub.s32 %s35, %s47
      %s49 = ssub.s32 %s36, %s43
      %s50 = sor.u32 %s48, %s49
      %p51 = scmp.eq.s32.totalorder %s50, 0
      %s53 = sadd.s32 %s52, 1
      %s54 = scalar_select %p51, %s52, %s53
      %p57 = pneg %p51
      %p58 = scmp.eq.s32.totalorder %s28, 1
      %p59 = por %p57, %p58
      %p60 = scmp.ne.s32.totalorder %s52, %s55
      %p61 = scmp.eq.s32.totalorder %s28, 0
      %p62 = por %p60, %p61
      %p63 = scmp.ne.s32.totalorder %s52, %s55
      %p64 = scmp.eq.s32.totalorder %s33, 1
      %p65 = por %p63, %p64
      %p66 = scmp.ne.s32.totalorder %s55, %s56
      %p67 = scmp.eq.s32.totalorder %s33, 0
      %p68 = por %p66, %p67
      %p69 = scmp.ne.s32.totalorder %s55, %s56
      %p70 = scmp.eq.s32.totalorder %s34, 1
      %p71 = por %p69, %p70
      %p73 = scmp.ne.s32.totalorder %s56, %s72
      %p74 = scmp.eq.s32.totalorder %s34, 0
      %p75 = por %p73, %p74
      %s76 = ssub.s32 %s35, %s47
      %p77 = scmp.eq.s32.totalorder %s76, 0
      %s79 = sadd.s32 %s78, 1
      %s80 = scalar_select %p77, %s78, %s79
      %p83 = pneg %p77
      %p84 = scmp.eq.s32.totalorder %s28, 1
      %p85 = por %p83, %p84
      %p86 = scmp.ne.s32.totalorder %s78, %s81
      %p87 = scmp.eq.s32.totalorder %s28, 0
      %p88 = por %p86, %p87
      %p89 = scmp.ne.s32.totalorder %s78, %s81
      %p90 = scmp.eq.s32.totalorder %s33, 1
      %p91 = por %p89, %p90
      %p92 = scmp.ne.s32.totalorder %s81, %s82
      %p93 = scmp.eq.s32.totalorder %s33, 0
      %p94 = por %p92, %p93
      %p95 = scmp.ne.s32.totalorder %s81, %s82
      %p96 = scmp.eq.s32.totalorder %s34, 1
      %p97 = por %p95, %p96
      %p99 = scmp.ne.s32.totalorder %s82, %s98
      %p100 = scmp.eq.s32.totalorder %s34, 0
      %p101 = por %p99, %p100
      %s102 = ssub.s32 %s35, %s47
      %p103 = scmp.eq.s32.totalorder %s102, 0
      %s105 = sadd.s32 %s104, 1
      %s106 = scalar_select %p103, %s104, %s105
      %p109 = pneg %p103
      %p110 = scmp.eq.s32.totalorder %s28, 1
      %p111 = por %p109, %p110
      %p112 = scmp.ne.s32.totalorder %s104, %s107
      %p113 = scmp.eq.s32.totalorder %s28, 0
      %p114 = por %p112, %p113
      %p115 = scmp.ne.s32.totalorder %s104, %s107
      %p116 = scmp.eq.s32.totalorder %s33, 1
      %p117 = por %p115, %p116
      %p118 = scmp.ne.s32.totalorder %s107, %s108
      %p119 = scmp.eq.s32.totalorder %s33, 0
      %p120 = por %p118, %p119
      %p121 = scmp.ne.s32.totalorder %s107, %s108
      %p122 = scmp.eq.s32.totalorder %s34, 1
      %p123 = por %p121, %p122
      %p125 = scmp.ne.s32.totalorder %s108, %s124
      %p126 = scmp.eq.s32.totalorder %s34, 0
      %p127 = por %p125, %p126
      %s129 = sadd.s32 %s128, 1
      %p132 = scmp.eq.s32.totalorder %s28, 1
      %p133 = scmp.ne.s32.totalorder %s128, %s130
      %p134 = scmp.eq.s32.totalorder %s28, 0
      %p135 = por %p133, %p134
      %p136 = scmp.ne.s32.totalorder %s128, %s130
      %p137 = scmp.eq.s32.totalorder %s33, 1
      %p138 = por %p136, %p137
      %p139 = scmp.ne.s32.totalorder %s130, %s131
      %p140 = scmp.eq.s32.totalorder %s33, 0
      %p141 = por %p139, %p140
      %p142 = scmp.ne.s32.totalorder %s130, %s131
      %p143 = scmp.eq.s32.totalorder %s34, 1
      %p144 = por %p142, %p143
      %p146 = scmp.ne.s32.totalorder %s131, %s145
      %p147 = scmp.eq.s32.totalorder %s34, 0
      %p148 = por %p146, %p147
      %s150 = sadd.s32 %s149, 1
      %p153 = scmp.eq.s32.totalorder %s28, 1
      %p154 = scmp.ne.s32.totalorder %s149, %s151
      %p155 = scmp.eq.s32.totalorder %s28, 0
      %p156 = por %p154, %p155
      %p157 = scmp.ne.s32.totalorder %s149, %s151
      %p158 = scmp.eq.s32.totalorder %s33, 1
      %p159 = por %p157, %p158
      %p160 = scmp.ne.s32.totalorder %s151, %s152
      %p161 = scmp.eq.s32.totalorder %s33, 0
      %p162 = por %p160, %p161
      %p163 = scmp.ne.s32.totalorder %s151, %s152
      %p164 = scmp.eq.s32.totalorder %s34, 1
      %p165 = por %p163, %p164
      %p167 = scmp.ne.s32.totalorder %s152, %s166
      %p168 = scmp.eq.s32.totalorder %s34, 0
      %p169 = por %p167, %p168
      %s171 = sadd.s32 %s170, 1
      %p174 = scmp.eq.s32.totalorder %s28, 1
      %p175 = scmp.ne.s32.totalorder %s170, %s172
      %p176 = scmp.eq.s32.totalorder %s28, 0
      %p177 = por %p175, %p176
      %p178 = scmp.ne.s32.totalorder %s170, %s172
      %p179 = scmp.eq.s32.totalorder %s33, 1
      %p180 = por %p178, %p179
      %p181 = scmp.ne.s32.totalorder %s172, %s173
      %p182 = scmp.eq.s32.totalorder %s33, 0
      %p183 = por %p181, %p182
      %p184 = scmp.ne.s32.totalorder %s172, %s173
      %p185 = scmp.eq.s32.totalorder %s34, 1
      %p186 = por %p184, %p185
      %p188 = scmp.ne.s32.totalorder %s173, %s187
      %p189 = scmp.eq.s32.totalorder %s34, 0
      %p190 = por %p188, %p189
      %s192 = sadd.s32 %s191, 1
      %p195 = scmp.eq.s32.totalorder %s28, 1
      %p196 = scmp.ne.s32.totalorder %s191, %s193
      %p197 = scmp.eq.s32.totalorder %s28, 0
      %p198 = por %p196, %p197
      %p199 = scmp.ne.s32.totalorder %s191, %s193
      %p200 = scmp.eq.s32.totalorder %s33, 1
      %p201 = por %p199, %p200
      %p202 = scmp.ne.s32.totalorder %s193, %s194
      %p203 = scmp.eq.s32.totalorder %s33, 0
      %p204 = por %p202, %p203
      %p205 = scmp.ne.s32.totalorder %s193, %s194
      %p206 = scmp.eq.s32.totalorder %s34, 1
      %p207 = por %p205, %p206
      %p209 = scmp.ne.s32.totalorder %s194, %s208
      %p210 = scmp.eq.s32.totalorder %s34, 0
      %p211 = por %p209, %p210
      %s213 = sadd.s32 %s212, 1
      %p216 = scmp.eq.s32.totalorder %s28, 1
      %p217 = scmp.ne.s32.totalorder %s212, %s214
      %p218 = scmp.eq.s32.totalorder %s28, 0
      %p219 = por %p217, %p218
      %p220 = scmp.ne.s32.totalorder %s212, %s214
      %p221 = scmp.eq.s32.totalorder %s33, 1
      %p222 = por %p220, %p221
      %p223 = scmp.ne.s32.totalorder %s214, %s215
      %p224 = scmp.eq.s32.totalorder %s33, 0
      %p225 = por %p223, %p224
      %p226 = scmp.ne.s32.totalorder %s214, %s215
      %p227 = scmp.eq.s32.totalorder %s34, 1
      %p228 = por %p226, %p227
      %p230 = scmp.ne.s32.totalorder %s215, %s229
      %p231 = scmp.eq.s32.totalorder %s34, 0
      %p232 = por %p230, %p231
      %s234 = sadd.s32 %s233, 1
      %p237 = scmp.eq.s32.totalorder %s28, 1
      %p238 = scmp.ne.s32.totalorder %s233, %s235
      %p239 = scmp.eq.s32.totalorder %s28, 0
      %p240 = por %p238, %p239
      %p241 = scmp.ne.s32.totalorder %s233, %s235
      %p242 = scmp.eq.s32.totalorder %s33, 1
      %p243 = por %p241, %p242
      %p244 = scmp.ne.s32.totalorder %s235, %s236
      %p245 = scmp.eq.s32.totalorder %s33, 0
      %p246 = por %p244, %p245
      %p247 = scmp.ne.s32.totalorder %s235, %s236
      %p248 = scmp.eq.s32.totalorder %s34, 1
      %p249 = por %p247, %p248
      %p251 = scmp.ne.s32.totalorder %s236, %s250
      %p252 = scmp.eq.s32.totalorder %s34, 0
      %p253 = por %p251, %p252
      %s255 = sadd.s32 %s254, 1
      %p258 = scmp.eq.s32.totalorder %s28, 1
      %p259 = scmp.ne.s32.totalorder %s254, %s256
      %p260 = scmp.eq.s32.totalorder %s28, 0
      %p261 = por %p259, %p260
      %p262 = scmp.ne.s32.totalorder %s254, %s256
      %p263 = scmp.eq.s32.totalorder %s33, 1
      %p264 = por %p262, %p263
      %p265 = scmp.ne.s32.totalorder %s256, %s257
      %p266 = scmp.eq.s32.totalorder %s33, 0
      %p267 = por %p265, %p266
      %p268 = scmp.ne.s32.totalorder %s256, %s257
      %p269 = scmp.eq.s32.totalorder %s34, 1
      %p270 = por %p268, %p269
      %p272 = scmp.ne.s32.totalorder %s257, %s271
      %p273 = scmp.eq.s32.totalorder %s34, 0
      %p274 = por %p272, %p273
      %s276 = sadd.s32 %s275, 1
      %p279 = scmp.eq.s32.totalorder %s28, 1
      %p280 = scmp.ne.s32.totalorder %s275, %s277
      %p281 = scmp.eq.s32.totalorder %s28, 0
      %p282 = por %p280, %p281
      %p283 = scmp.ne.s32.totalorder %s275, %s277
      %p284 = scmp.eq.s32.totalorder %s33, 1
      %p285 = por %p283, %p284
      %p286 = scmp.ne.s32.totalorder %s277, %s278
      %p287 = scmp.eq.s32.totalorder %s33, 0
      %p288 = por %p286, %p287
      %p289 = scmp.ne.s32.totalorder %s277, %s278
      %p290 = scmp.eq.s32.totalorder %s34, 1
      %p291 = por %p289, %p290
      %p293 = scmp.ne.s32.totalorder %s278, %s292
      %p294 = scmp.eq.s32.totalorder %s34, 0
      %p295 = por %p293, %p294
      %s296 = ssub.s32 %s35, %s47
      %s297 = ssub.s32 %s36, %s43
      %s298 = sor.u32 %s296, %s297
      %p299 = scmp.eq.s32.totalorder %s298, 0
      %s301 = sadd.s32 %s300, 1
      %s302 = scalar_select %p299, %s300, %s301
      %p305 = pneg %p299
      %p306 = scmp.eq.s32.totalorder %s28, 1
      %p307 = por %p305, %p306
      %p308 = scmp.ne.s32.totalorder %s300, %s303
      %p309 = scmp.eq.s32.totalorder %s28, 0
      %p310 = por %p308, %p309
      %p311 = scmp.ne.s32.totalorder %s300, %s303
      %p312 = scmp.eq.s32.totalorder %s33, 1
      %p313 = por %p311, %p312
      %p314 = scmp.ne.s32.totalorder %s303, %s304
      %p315 = scmp.eq.s32.totalorder %s33, 0
      %p316 = por %p314, %p315
      %p317 = scmp.ne.s32.totalorder %s303, %s304
      %p318 = scmp.eq.s32.totalorder %s34, 1
      %p319 = por %p317, %p318
      %p321 = scmp.ne.s32.totalorder %s304, %s320
      %p322 = scmp.eq.s32.totalorder %s34, 0
      %p323 = por %p321, %p322
      %p324 = scmp.le.s32.totalorder 1, %s28
      %p325 = scmp.lt.s32.totalorder %s28, 3
      %p326 = pnand %p324, %p325
      %p327 = pneg %p326
      // Predicated region
      $region9: #{tpu_custom_call.1} parent=5 // pred_check
        _
      $region10: #{tpu_custom_call.1} parent=5 // pred_check_branch
        %329 = sbr.rel (%p326) target = $region12
      $region11: #{tpu_custom_call.1} parent=5 // pred_region
        %s330 = ssub.s32 %s28, 1
        // Predicated region
        $region13: #{tpu_custom_call.1} parent=11 // pred_check
          %p331 = pneg %p141
        $region14: #{tpu_custom_call.1} parent=11 // pred_check_branch
          %333 = sbr.rel (%p331) target = $region16
        $region15: #{tpu_custom_call.1} parent=11 // pred_region
          %s335 = ssub.s32 256, 256
          %336 = vsyncadd [#allocation13], %s335
          %s337 = sshll.u32 [#allocation12], 4
          %s338 = int_to_ptr.vmem [resolvable:$true] %s337
          %343 = dma.hbm_to_vmem [thread:$0]  %s3, 256, %s338, [#allocation13], 64, 64, 4
        $region16: #{tpu_custom_call.1} parent=11 // pred_fallthru
          _
        // Predicated region
        $region17: #{tpu_custom_call.1} parent=11 // pred_check
          %p344 = pneg %p162
        $region18: #{tpu_custom_call.1} parent=11 // pred_check_branch
          %346 = sbr.rel (%p344) target = $region20
        $region19: #{tpu_custom_call.1} parent=11 // pred_region
          _
        $region20: #{tpu_custom_call.1} parent=11 // pred_fallthru
          _
        // Predicated region
        $region21: #{tpu_custom_call.1} parent=11 // pred_check
          %p347 = pneg %p183
        $region22: #{tpu_custom_call.1} parent=11 // pred_check_branch
          %349 = sbr.rel (%p347) target = $region24
        $region23: #{tpu_custom_call.1} parent=11 // pred_region
          _
        $region24: #{tpu_custom_call.1} parent=11 // pred_fallthru
          _
        // Predicated region
        $region25: #{tpu_custom_call.1} parent=11 // pred_check
          %p350 = pneg %p204
        $region26: #{tpu_custom_call.1} parent=11 // pred_check_branch
          %352 = sbr.rel (%p350) target = $region28
        $region27: #{tpu_custom_call.1} parent=11 // pred_region
          _
        $region28: #{tpu_custom_call.1} parent=11 // pred_fallthru
          _
        // Predicated region
        $region29: #{tpu_custom_call.1} parent=11 // pred_check
          %p353 = pneg %p225
        $region30: #{tpu_custom_call.1} parent=11 // pred_check_branch
          %355 = sbr.rel (%p353) target = $region32
        $region31: #{tpu_custom_call.1} parent=11 // pred_region
          %s357 = ssub.s32 256, 256
          %358 = vsyncadd [#allocation13], %s357
          %s359 = sshll.u32 [#allocation14], 4
          %s360 = int_to_ptr.vmem [resolvable:$true] %s359
          %365 = dma.hbm_to_vmem [thread:$0]  %s7, 256, %s360, [#allocation13], 64, 64, 4
        $region32: #{tpu_custom_call.1} parent=11 // pred_fallthru
          _
        // Predicated region
        $region33: #{tpu_custom_call.1} parent=11 // pred_check
          %p366 = pneg %p246
        $region34: #{tpu_custom_call.1} parent=11 // pred_check_branch
          %368 = sbr.rel (%p366) target = $region36
        $region35: #{tpu_custom_call.1} parent=11 // pred_region
          %s370 = ssub.s32 16, 16
          %371 = vsyncadd [#allocation16], %s370
          %s373 = sshll.u32 [#allocation15], 4
          %s374 = int_to_ptr.vmem [resolvable:$true] %s373
          %376 = dma.hbm_to_vmem [thread:$0]  %s8, 16, %s374, [#allocation16]
        $region36: #{tpu_custom_call.1} parent=11 // pred_fallthru
          _
        // Predicated region
        $region37: #{tpu_custom_call.1} parent=11 // pred_check
          %p377 = pneg %p267
        $region38: #{tpu_custom_call.1} parent=11 // pred_check_branch
          %379 = sbr.rel (%p377) target = $region40
        $region39: #{tpu_custom_call.1} parent=11 // pred_region
          _
        $region40: #{tpu_custom_call.1} parent=11 // pred_fallthru
          _
        // Predicated region
        $region41: #{tpu_custom_call.1} parent=11 // pred_check
          %p380 = pneg %p288
        $region42: #{tpu_custom_call.1} parent=11 // pred_check_branch
          %382 = sbr.rel (%p380) target = $region44
        $region43: #{tpu_custom_call.1} parent=11 // pred_region
          _
        $region44: #{tpu_custom_call.1} parent=11 // pred_fallthru
          _
      $region12: #{tpu_custom_call.1} parent=5 // pred_fallthru
        _
      %p383 = scmp.lt.s32.totalorder %s28, 2
      // Predicated region
      $region45: #{tpu_custom_call.1} parent=5 // pred_check
        %p384 = pneg %p383
      $region46: #{tpu_custom_call.1} parent=5 // pred_check_branch
        %386 = sbr.rel (%p384) target = $region48
      $region47: #{tpu_custom_call.1} parent=5 // pred_region
        // Predicated region
        $region49: #{tpu_custom_call.1} parent=47 // pred_check
          %p387 = pneg %p62
        $region50: #{tpu_custom_call.1} parent=47 // pred_check_branch
          %389 = sbr.rel (%p387) target = $region52
        $region51: #{tpu_custom_call.1} parent=47 // pred_region
          %s390 = sand.u32 %s52, 1
          %s391 = scalar_lea.sflag [#allocation7], %s390
          %s392 = sand.u32 %s52, 1
          %s393 = smul.addr %s392, 8
          %s394 = scalar_lea.vmem [#allocation6], %s393
          %s396 = ssub.s32 128, 128
          %397 = vsyncadd %s391, %s396
          %s398 = sadd.s32 %s36, %s35
          %s399 = smul.addr %s398, 128
          %s400 = scalar_lea.hbm %s0, %s399
          %s402 = sshll.u32 %s394, 4
          %s403 = int_to_ptr.vmem [resolvable:$true] %s402
          %405 = dma.hbm_to_vmem [thread:$0]  %s400, 128, %s403, %s391
        $region52: #{tpu_custom_call.1} parent=47 // pred_fallthru
          _
        // Predicated region
        $region53: #{tpu_custom_call.1} parent=47 // pred_check
          %p406 = pneg %p88
        $region54: #{tpu_custom_call.1} parent=47 // pred_check_branch
          %408 = sbr.rel (%p406) target = $region56
        $region55: #{tpu_custom_call.1} parent=47 // pred_region
          %s409 = sand.u32 %s28, 1
          %s410 = scalar_lea.sflag [#allocation10], %s409
          %s411 = sand.u32 %s78, 1
          %s412 = smul.addr %s411, 16
          %s413 = scalar_lea.vmem [#allocation9], %s412
          %s415 = ssub.s32 256, 256
          %416 = vsyncadd %s410, %s415
          %s417 = smul.addr %s35, 2
          %s418 = smul.addr %s417, 128
          %s419 = scalar_lea.hbm %s1, %s418
          %s420 = sshll.u32 %s413, 4
          %s421 = int_to_ptr.vmem [resolvable:$true] %s420
          %426 = dma.hbm_to_vmem [thread:$0]  %s419, 256, %s421, %s410, 128, 128, 8
        $region56: #{tpu_custom_call.1} parent=47 // pred_fallthru
          _
        // Predicated region
        $region57: #{tpu_custom_call.1} parent=47 // pred_check
          %p427 = pneg %p114
        $region58: #{tpu_custom_call.1} parent=47 // pred_check_branch
          %429 = sbr.rel (%p427) target = $region60
        $region59: #{tpu_custom_call.1} parent=47 // pred_region
          %s430 = sand.u32 %s28, 1
          %s431 = scalar_lea.sflag [#allocation10], %s430
          %s432 = sand.u32 %s104, 1
          %s433 = smul.addr %s432, 16
          %s434 = scalar_lea.vmem [#allocation11], %s433
          %s436 = ssub.s32 256, 256
          %437 = vsyncadd %s431, %s436
          %s438 = smul.addr %s35, 2
          %s439 = smul.addr %s438, 128
          %s440 = scalar_lea.hbm %s2, %s439
          %s441 = sshll.u32 %s434, 4
          %s442 = int_to_ptr.vmem [resolvable:$true] %s441
          %447 = dma.hbm_to_vmem [thread:$0]  %s440, 256, %s442, %s431, 128, 128, 8
        $region60: #{tpu_custom_call.1} parent=47 // pred_fallthru
          _
      $region48: #{tpu_custom_call.1} parent=5 // pred_fallthru
        _
      %p448 = scmp.le.s32.totalorder 1, %s28
      %p449 = scmp.lt.s32.totalorder %s28, 3
      %p450 = pnand %p448, %p449
      %p451 = pneg %p450
      // Predicated region
      $region61: #{tpu_custom_call.1} parent=5 // pred_check
        _
      $region62: #{tpu_custom_call.1} parent=5 // pred_check_branch
        %453 = sbr.rel (%p450) target = $region64
      $region63: #{tpu_custom_call.1} parent=5 // pred_region
        %s454 = ssub.s32 %s28, 1
        %s455 = sand.u32 %s55, 1
        %s456 = scalar_lea.sflag [#allocation7], %s455
        %s457 = sand.u32 %s55, 1
        %s458 = smul.addr %s457, 8
        %s459 = scalar_lea.vmem [#allocation6], %s458
        // Predicated region
        $region65: #{tpu_custom_call.1} parent=63 // pred_check
          %p460 = pneg %p68
        $region66: #{tpu_custom_call.1} parent=63 // pred_check_branch
          %462 = sbr.rel (%p460) target = $region68
        $region67: #{tpu_custom_call.1} parent=63 // pred_region
          %463 = dma.done %s456, 128
        $region68: #{tpu_custom_call.1} parent=63 // pred_fallthru
          _
        %s464 = sand.u32 %s33, 1
        %s465 = scalar_lea.sflag [#allocation10], %s464
        %s466 = sand.u32 %s81, 1
        %s467 = smul.addr %s466, 16
        %s468 = scalar_lea.vmem [#allocation9], %s467
        // Predicated region
        $region69: #{tpu_custom_call.1} parent=63 // pred_check
          %p469 = pneg %p94
        $region70: #{tpu_custom_call.1} parent=63 // pred_check_branch
          %471 = sbr.rel (%p469) target = $region72
        $region71: #{tpu_custom_call.1} parent=63 // pred_region
          %472 = dma.done %s465, 256
        $region72: #{tpu_custom_call.1} parent=63 // pred_fallthru
          _
        %s473 = sand.u32 %s33, 1
        %s474 = scalar_lea.sflag [#allocation10], %s473
        %s475 = sand.u32 %s107, 1
        %s476 = smul.addr %s475, 16
        %s477 = scalar_lea.vmem [#allocation11], %s476
        // Predicated region
        $region73: #{tpu_custom_call.1} parent=63 // pred_check
          %p478 = pneg %p120
        $region74: #{tpu_custom_call.1} parent=63 // pred_check_branch
          %480 = sbr.rel (%p478) target = $region76
        $region75: #{tpu_custom_call.1} parent=63 // pred_region
          %481 = dma.done %s474, 256
        $region76: #{tpu_custom_call.1} parent=63 // pred_fallthru
          _
        // Predicated region
        $region77: #{tpu_custom_call.1} parent=63 // pred_check
          %p482 = pneg %p141
        $region78: #{tpu_custom_call.1} parent=63 // pred_check_branch
          %484 = sbr.rel (%p482) target = $region80
        $region79: #{tpu_custom_call.1} parent=63 // pred_region
          %485 = dma.done [#allocation13], 256
        $region80: #{tpu_custom_call.1} parent=63 // pred_fallthru
          _
        // Predicated region
        $region81: #{tpu_custom_call.1} parent=63 // pred_check
          %p486 = pneg %p225
        $region82: #{tpu_custom_call.1} parent=63 // pred_check_branch
          %488 = sbr.rel (%p486) target = $region84
        $region83: #{tpu_custom_call.1} parent=63 // pred_region
          %489 = dma.done [#allocation13], 256
        $region84: #{tpu_custom_call.1} parent=63 // pred_fallthru
          _
        // Predicated region
        $region85: #{tpu_custom_call.1} parent=63 // pred_check
          %p490 = pneg %p246
        $region86: #{tpu_custom_call.1} parent=63 // pred_check_branch
          %492 = sbr.rel (%p490) target = $region88
        $region87: #{tpu_custom_call.1} parent=63 // pred_region
          %493 = dma.done [#allocation16], 16
        $region88: #{tpu_custom_call.1} parent=63 // pred_fallthru
          _
        %s494 = sand.u32 %s55, 1
        %s495 = scalar_lea.sflag [#allocation7], %s494
        %s496 = sand.u32 %s55, 1
        %s497 = smul.addr %s496, 8
        %s498 = scalar_lea.vmem [#allocation6], %s497
        %p499 = pneg %p68
        %p500 = pneg %p65
        %s501 = sand.u32 %s33, 1
        %s502 = scalar_lea.sflag [#allocation10], %s501
        %s503 = sand.u32 %s81, 1
        %s504 = smul.addr %s503, 16
        %s505 = scalar_lea.vmem [#allocation9], %s504
        %p506 = pneg %p94
        %p507 = pneg %p91
        %s508 = sand.u32 %s33, 1
        %s509 = scalar_lea.sflag [#allocation10], %s508
        %s510 = sand.u32 %s107, 1
        %s511 = smul.addr %s510, 16
        %s512 = scalar_lea.vmem [#allocation11], %s511
        %p513 = pneg %p120
        %p514 = pneg %p117
        %p515 = pneg %p141
        %p516 = pneg %p138
        %p517 = pneg %p162
        %p518 = pneg %p159
        %p519 = pneg %p183
        %p520 = pneg %p180
        %p521 = pneg %p204
        %p522 = pneg %p201
        %p523 = pneg %p225
        %p524 = pneg %p222
        %p525 = pneg %p246
        %p526 = pneg %p243
        %p527 = pneg %p267
        %p528 = pneg %p264
        %p529 = pneg %p288
        %p530 = pneg %p285
        %p531 = pneg %p316
        %p532 = pneg %p313
        %s533 = sand.u32 %s303, 1
        %s534 = scalar_lea.sflag [#allocation8], %s533
        %s535 = sand.u32 %s303, 1
        %s536 = smul.addr %s535, 8
        %s537 = scalar_lea.vmem [#allocation17], %s536
        %v539 = vld [vmem:[%s459] sm:$0xff]
        %v540 = vpack.c.bf16 %v539, %v539
        %v541 = vld [vmem:[%s468] sm:$0xff]
        %v542 = vld [vmem:[%s468 + $0x8] sm:$0xff]
        %v543 = vpack.c.bf16 %v542, %v541
        %v544 = vld [vmem:[%s477] sm:$0xff]
        %v545 = vld [vmem:[%s477 + $0x8] sm:$0xff]
        %v546 = vpack.c.bf16 %v545, %v544
        %v547 = vld [vmem:[#allocation12] sm:$0xf]
        %v548 = vld [vmem:[#allocation12 + $0x4] sm:$0xf]
        %v549 = vld [vmem:[#allocation12 + $0x8] sm:$0xf]
        %v550 = vld [vmem:[#allocation12 + $0xc] sm:$0xf]
        %v551 = vld [vmem:[%s4] sm:$0x1]
        %v553 = vlaneseq
        %v554 = vshrl.u32 %v553, 7
        %v555 = vsub.s32 0, %v554
        %v556 = vrot.slane %v551, %v555
        %v562 = vunpack.c.l.b16 %v547
        %v563 = vunpack.c.l.b16 %v548
        %v564 = vunpack.c.l.b16 %v549
        %v565 = vunpack.c.l.b16 %v550
        %v566 = vpack.c.b16 %v563, %v562
        %v567 = vpack.c.b16 %v565, %v564
        %vm570 = vcmask 261120
        %v572 = vsel %vm570, %v540, 0
        %574 = vmatprep.subr.bf16.mxu0 0
        %575 = vmatpush1.bf16.msra.mxu0 %v566
        %576 = vmatprep.subr.bf16.mxu0 0
        %577 = vmatpush1.bf16.msra.mxu0 %v567
        %578 = vmatprep.subr.bf16.mxu0 0
        %579 = vmatpush1.bf16.msra.mxu0 0
        %580 = vmatprep.subr.bf16.mxu0 0
        %581 = vmatpush1.bf16.msra.mxu0 0
        %582 = vmatprep.subr.bf16.mxu0 0
        %583 = vmatpush1.bf16.msra.mxu0 0
        %584 = vmatprep.subr.bf16.mxu0 0
        %585 = vmatpush1.bf16.msra.mxu0 0
        %586 = vmatprep.subr.bf16.mxu0 0
        %587 = vmatpush1.bf16.msra.mxu0 0
        %588 = vmatprep.subr.bf16.mxu0 0
        %589 = vmatpush1.bf16.msra.mxu0 0
        %590 = vmatprep.subr.bf16.mxu0 0
        %591 = vmatpush1.bf16.msra.mxu0 0
        %592 = vmatprep.subr.bf16.mxu0 0
        %593 = vmatpush1.bf16.msra.mxu0 0
        %594 = vmatprep.subr.bf16.mxu0 0
        %595 = vmatpush1.bf16.msra.mxu0 0
        %596 = vmatprep.subr.bf16.mxu0 0
        %597 = vmatpush1.bf16.msra.mxu0 0
        %598 = vmatprep.subr.bf16.mxu0 0
        %599 = vmatpush1.bf16.msra.mxu0 0
        %600 = vmatprep.subr.bf16.mxu0 0
        %601 = vmatpush1.bf16.msra.mxu0 0
        %602 = vmatprep.subr.bf16.mxu0 0
        %603 = vmatpush1.bf16.msra.mxu0 0
        %604 = vmatprep.subr.bf16.mxu0 0
        %605 = vmatpush1.bf16.msra.mxu0 0
        %606 = vmatprep.mubr.bf16.mxu0 0
        %607 = vmatmul.mubr.bf16.gmra.mrb[0].mxu0 %v572
        %v608 = vpop.f32.mrb[0].mxu0
        %v609 = vadd.f32 %v556, %v608
        %v610 = vpop.f32.mrb[0].mxu0
        %v611 = vpop.f32.mrb[0].mxu0
        %v612 = vpop.f32.mrb[0].mxu0
        %613 = vdwg.mxu0
        %v614 = vmul.f32 %v609, 0.35355338
        %v615 = vpack.c.bf16 %v614, %v614
        %vm616 = vcmask 257024
        %617 = vst.msk [vmem:[#allocation2] sm:$0xf] %vm616, %v615
        %v618 = vld [vmem:[%s5] sm:$0xf]
        %v619 = vld [vmem:[%s5 + $0x4] sm:$0xf]
        %v620 = vld [vmem:[%s5 + $0x8] sm:$0xf]
        %v621 = vld [vmem:[%s5 + $0xc] sm:$0xf]
        %v622 = vld [vmem:[%s6] sm:$0x1]
        %v624 = vlaneseq
        %v625 = vshrl.u32 %v624, 7
        %v626 = vsub.s32 0, %v625
        %v627 = vrot.slane %v622, %v626
        %v633 = vunpack.c.l.b16 %v618
        %v634 = vunpack.c.l.b16 %v619
        %v635 = vunpack.c.l.b16 %v620
        %v636 = vunpack.c.l.b16 %v621
        %v637 = vpack.c.b16 %v634, %v633
        %v638 = vpack.c.b16 %v636, %v635
        %v642 = vsel %vm570, %v543, 0
        %644 = vmatprep.subr.bf16.mxu0 0
        %645 = vmatpush1.bf16.msra.mxu0 %v637
        %646 = vmatprep.subr.bf16.mxu0 0
        %647 = vmatpush1.bf16.msra.mxu0 %v638
        %648 = vmatprep.subr.bf16.mxu0 0
        %649 = vmatpush1.bf16.msra.mxu0 0
        %650 = vmatprep.subr.bf16.mxu0 0
        %651 = vmatpush1.bf16.msra.mxu0 0
        %652 = vmatprep.subr.bf16.mxu0 0
        %653 = vmatpush1.bf16.msra.mxu0 0
        %654 = vmatprep.subr.bf16.mxu0 0
        %655 = vmatpush1.bf16.msra.mxu0 0
        %656 = vmatprep.subr.bf16.mxu0 0
        %657 = vmatpush1.bf16.msra.mxu0 0
        %658 = vmatprep.subr.bf16.mxu0 0
        %659 = vmatpush1.bf16.msra.mxu0 0
        %660 = vmatprep.subr.bf16.mxu0 0
        %661 = vmatpush1.bf16.msra.mxu0 0
        %662 = vmatprep.subr.bf16.mxu0 0
        %663 = vmatpush1.bf16.msra.mxu0 0
        %664 = vmatprep.subr.bf16.mxu0 0
        %665 = vmatpush1.bf16.msra.mxu0 0
        %666 = vmatprep.subr.bf16.mxu0 0
        %667 = vmatpush1.bf16.msra.mxu0 0
        %668 = vmatprep.subr.bf16.mxu0 0
        %669 = vmatpush1.bf16.msra.mxu0 0
        %670 = vmatprep.subr.bf16.mxu0 0
        %671 = vmatpush1.bf16.msra.mxu0 0
        %672 = vmatprep.subr.bf16.mxu0 0
        %673 = vmatpush1.bf16.msra.mxu0 0
        %674 = vmatprep.subr.bf16.mxu0 0
        %675 = vmatpush1.bf16.msra.mxu0 0
        %676 = vmatprep.mubr.bf16.mxu0 0
        %677 = vmatmul.mubr.bf16.gmra.mrb[0].mxu0 %v642
        %v678 = vpop.f32.mrb[0].mxu0
        %v679 = vadd.f32 %v627, %v678
        %v680 = vpop.f32.mrb[0].mxu0
        %v681 = vpop.f32.mrb[0].mxu0
        %v682 = vadd.f32 %v627, %v681
        %v683 = vpop.f32.mrb[0].mxu0
        %684 = vdwg.mxu0
        %v685 = vpack.c.bf16 %v682, %v679
        %686 = vst.msk [vmem:[#allocation3] sm:$0xff] %vm570, %v685
        %v687 = vld [vmem:[#allocation14] sm:$0xf]
        %v688 = vld [vmem:[#allocation14 + $0x4] sm:$0xf]
        %v689 = vld [vmem:[#allocation14 + $0x8] sm:$0xf]
        %v690 = vld [vmem:[#allocation14 + $0xc] sm:$0xf]
        %v691 = vld [vmem:[#allocation15] sm:$0x1]
        %v693 = vlaneseq
        %v694 = vshrl.u32 %v693, 7
        %v695 = vsub.s32 0, %v694
        %v696 = vrot.slane %v691, %v695
        %v702 = vunpack.c.l.b16 %v687
        %v703 = vunpack.c.l.b16 %v688
        %v704 = vunpack.c.l.b16 %v689
        %v705 = vunpack.c.l.b16 %v690
        %v706 = vpack.c.b16 %v703, %v702
        %v707 = vpack.c.b16 %v705, %v704
        %v711 = vsel %vm570, %v546, 0
        %713 = vmatprep.subr.bf16.mxu0 0
        %714 = vmatpush1.bf16.msra.mxu0 %v706
        %715 = vmatprep.subr.bf16.mxu0 0
        %716 = vmatpush1.bf16.msra.mxu0 %v707
        %717 = vmatprep.subr.bf16.mxu0 0
        %718 = vmatpush1.bf16.msra.mxu0 0
        %719 = vmatprep.subr.bf16.mxu0 0
        %720 = vmatpush1.bf16.msra.mxu0 0
        %721 = vmatprep.subr.bf16.mxu0 0
        %722 = vmatpush1.bf16.msra.mxu0 0
        %723 = vmatprep.subr.bf16.mxu0 0
        %724 = vmatpush1.bf16.msra.mxu0 0
        %725 = vmatprep.subr.bf16.mxu0 0
        %726 = vmatpush1.bf16.msra.mxu0 0
        %727 = vmatprep.subr.bf16.mxu0 0
        %728 = vmatpush1.bf16.msra.mxu0 0
        %729 = vmatprep.subr.bf16.mxu0 0
        %730 = vmatpush1.bf16.msra.mxu0 0
        %731 = vmatprep.subr.bf16.mxu0 0
        %732 = vmatpush1.bf16.msra.mxu0 0
        %733 = vmatprep.subr.bf16.mxu0 0
        %734 = vmatpush1.bf16.msra.mxu0 0
        %735 = vmatprep.subr.bf16.mxu0 0
        %736 = vmatpush1.bf16.msra.mxu0 0
        %737 = vmatprep.subr.bf16.mxu0 0
        %738 = vmatpush1.bf16.msra.mxu0 0
        %739 = vmatprep.subr.bf16.mxu0 0
        %740 = vmatpush1.bf16.msra.mxu0 0
        %741 = vmatprep.subr.bf16.mxu0 0
        %742 = vmatpush1.bf16.msra.mxu0 0
        %743 = vmatprep.subr.bf16.mxu0 0
        %744 = vmatpush1.bf16.msra.mxu0 0
        %745 = vmatprep.mubr.bf16.mxu0 0
        %746 = vmatmul.mubr.bf16.gmra.mrb[0].mxu0 %v711
        %v747 = vpop.f32.mrb[0].mxu0
        %v748 = vadd.f32 %v696, %v747
        %v749 = vpop.f32.mrb[0].mxu0
        %v750 = vpop.f32.mrb[0].mxu0
        %v751 = vadd.f32 %v696, %v750
        %v752 = vpop.f32.mrb[0].mxu0
        %753 = vdwg.mxu0
        %v754 = vpack.c.bf16 %v751, %v748
        %755 = vst.msk [vmem:[#allocation4] sm:$0xff] %vm570, %v754
        %v756 = vld [vmem:[#allocation2] sm:$0xf]
        %v757 = vld [vmem:[#allocation3] sm:$0xff]
        %v758 = vld [vmem:[#allocation4] sm:$0xff]
        %vm759 = vcmask 64512
        %v761 = vsel %vm759, %v756, 0
        %v764 = vsel %vm759, %v757, 0
        %766 = vmatprep.subr.bf16.mxu0 0
        %767 = vmatpush1.bf16.xpose.msra.mxu0 %v764
        %768 = vmatprep.subr.bf16.mxu0 0
        %769 = vmatpush1.bf16.xpose.msra.mxu0 0
        %770 = vmatprep.subr.bf16.mxu0 0
        %771 = vmatpush1.bf16.xpose.msra.mxu0 0
        %772 = vmatprep.subr.bf16.mxu0 0
        %773 = vmatpush1.bf16.xpose.msra.mxu0 0
        %774 = vmatprep.subr.bf16.mxu0 0
        %775 = vmatpush1.bf16.xpose.msra.mxu0 0
        %776 = vmatprep.subr.bf16.mxu0 0
        %777 = vmatpush1.bf16.xpose.msra.mxu0 0
        %778 = vmatprep.subr.bf16.mxu0 0
        %779 = vmatpush1.bf16.xpose.msra.mxu0 0
        %780 = vmatprep.subr.bf16.mxu0 0
        %781 = vmatpush1.bf16.xpose.msra.mxu0 0
        %782 = vmatprep.subr.bf16.mxu0 0
        %783 = vmatpush1.bf16.xpose.msra.mxu0 0
        %784 = vmatprep.subr.bf16.mxu0 0
        %785 = vmatpush1.bf16.xpose.msra.mxu0 0
        %786 = vmatprep.subr.bf16.mxu0 0
        %787 = vmatpush1.bf16.xpose.msra.mxu0 0
        %788 = vmatprep.subr.bf16.mxu0 0
        %789 = vmatpush1.bf16.xpose.msra.mxu0 0
        %790 = vmatprep.subr.bf16.mxu0 0
        %791 = vmatpush1.bf16.xpose.msra.mxu0 0
        %792 = vmatprep.subr.bf16.mxu0 0
        %793 = vmatpush1.bf16.xpose.msra.mxu0 0
        %794 = vmatprep.subr.bf16.mxu0 0
        %795 = vmatpush1.bf16.xpose.msra.mxu0 0
        %796 = vmatprep.subr.bf16.mxu0 0
        %797 = vmatpush1.bf16.xpose.msra.mxu0 0
        %798 = vmatprep.mubr.bf16.mxu0 0
        %799 = vmatmul.mubr.bf16.gmra.mrb[0].mxu0 %v761
        %v800 = vpop.f32.mrb[0].mxu0
        %v801 = vadd.f32 0.0, %v800
        %v802 = vpop.f32.mrb[0].mxu0
        %v803 = vpop.f32.mrb[0].mxu0
        %v804 = vpop.f32.mrb[0].mxu0
        %805 = vdwg.mxu0
        %vm806 = vcmask 130048
        %v807 = vsel %vm806, %v801, -inf
        %808 = vmax.xlane.f32.xlu0 %v807
        %v809 = vpop.xlane.xlu0 %808
        %v810 = vsub.f32 %v801, %v809
        %v811 = vmul.f32 %v810, 1.442695
        %v812 = vpow.pop %v811
        %v813 = vsel %vm806, %v812, 0.0
        %814 = vadd.xlane.f32.xlu0 %v813
        %v815 = vpop.xlane.xlu0 %814
        %v816 = vrcp.pop %v815
        %v817 = vmul.f32 %v812, %v816
        %v818 = vpack.c.bf16 %v817, %v817
        %v820 = vsel %vm806, %v818, 0
        %822 = vmatprep.subr.bf16.mxu0 0
        %823 = vmatpush1.bf16.msra.mxu0 %v758
        %824 = vmatprep.subr.bf16.mxu0 0
        %825 = vmatpush1.bf16.msra.mxu0 0
        %826 = vmatprep.subr.bf16.mxu0 0
        %827 = vmatpush1.bf16.msra.mxu0 0
        %828 = vmatprep.subr.bf16.mxu0 0
        %829 = vmatpush1.bf16.msra.mxu0 0
        %830 = vmatprep.subr.bf16.mxu0 0
        %831 = vmatpush1.bf16.msra.mxu0 0
        %832 = vmatprep.subr.bf16.mxu0 0
        %833 = vmatpush1.bf16.msra.mxu0 0
        %834 = vmatprep.subr.bf16.mxu0 0
        %835 = vmatpush1.bf16.msra.mxu0 0
        %836 = vmatprep.subr.bf16.mxu0 0
        %837 = vmatpush1.bf16.msra.mxu0 0
        %838 = vmatprep.subr.bf16.mxu0 0
        %839 = vmatpush1.bf16.msra.mxu0 0
        %840 = vmatprep.subr.bf16.mxu0 0
        %841 = vmatpush1.bf16.msra.mxu0 0
        %842 = vmatprep.subr.bf16.mxu0 0
        %843 = vmatpush1.bf16.msra.mxu0 0
        %844 = vmatprep.subr.bf16.mxu0 0
        %845 = vmatpush1.bf16.msra.mxu0 0
        %846 = vmatprep.subr.bf16.mxu0 0
        %847 = vmatpush1.bf16.msra.mxu0 0
        %848 = vmatprep.subr.bf16.mxu0 0
        %849 = vmatpush1.bf16.msra.mxu0 0
        %850 = vmatprep.subr.bf16.mxu0 0
        %851 = vmatpush1.bf16.msra.mxu0 0
        %852 = vmatprep.subr.bf16.mxu0 0
        %853 = vmatpush1.bf16.msra.mxu0 0
        %854 = vmatprep.mubr.bf16.mxu0 0
        %855 = vmatmul.mubr.bf16.gmra.mrb[0].mxu0 %v820
        %v856 = vpop.f32.mrb[0].mxu0
        %v857 = vadd.f32 0.0, %v856
        %v858 = vpop.f32.mrb[0].mxu0
        %v859 = vpop.f32.mrb[0].mxu0
        %v860 = vpop.f32.mrb[0].mxu0
        %861 = vdwg.mxu0
        %v862 = vpack.c.bf16 %v857, %v857
        %vm863 = vcmask 60416
        %864 = vst.msk [vmem:[#allocation5] sm:$0xf] %vm863, %v862
        %v865 = vld [vmem:[#allocation2] sm:$0xf]
        %v866 = vld [vmem:[#allocation3] sm:$0xff]
        %v867 = vld [vmem:[#allocation4] sm:$0xff]
        %v869 = vunpack.c.l.b16 %v865
        %v870 = vpack.c.b16 %v869, %v869
        %871 = vrot.lane.b32.xlu0 %v870, 120
        %v872 = vpop.permute.xlu0 %871
        %874 = vrot.lane.b32.xlu0 %v866, 120
        %v875 = vpop.permute.xlu0 %874
        %v877 = vsel %vm759, %v872, 0
        %v880 = vsel %vm759, %v875, 0
        %882 = vmatprep.subr.bf16.mxu0 0
        %883 = vmatpush1.bf16.xpose.msra.mxu0 %v880
        %884 = vmatprep.subr.bf16.mxu0 0
        %885 = vmatpush1.bf16.xpose.msra.mxu0 0
        %886 = vmatprep.subr.bf16.mxu0 0
        %887 = vmatpush1.bf16.xpose.msra.mxu0 0
        %888 = vmatprep.subr.bf16.mxu0 0
        %889 = vmatpush1.bf16.xpose.msra.mxu0 0
        %890 = vmatprep.subr.bf16.mxu0 0
        %891 = vmatpush1.bf16.xpose.msra.mxu0 0
        %892 = vmatprep.subr.bf16.mxu0 0
        %893 = vmatpush1.bf16.xpose.msra.mxu0 0
        %894 = vmatprep.subr.bf16.mxu0 0
        %895 = vmatpush1.bf16.xpose.msra.mxu0 0
        %896 = vmatprep.subr.bf16.mxu0 0
        %897 = vmatpush1.bf16.xpose.msra.mxu0 0
        %898 = vmatprep.subr.bf16.mxu0 0
        %899 = vmatpush1.bf16.xpose.msra.mxu0 0
        %900 = vmatprep.subr.bf16.mxu0 0
        %901 = vmatpush1.bf16.xpose.msra.mxu0 0
        %902 = vmatprep.subr.bf16.mxu0 0
        %903 = vmatpush1.bf16.xpose.msra.mxu0 0
        %904 = vmatprep.subr.bf16.mxu0 0
        %905 = vmatpush1.bf16.xpose.msra.mxu0 0
        %906 = vmatprep.subr.bf16.mxu0 0
        %907 = vmatpush1.bf16.xpose.msra.mxu0 0
        %908 = vmatprep.subr.bf16.mxu0 0
        %909 = vmatpush1.bf16.xpose.msra.mxu0 0
        %910 = vmatprep.subr.bf16.mxu0 0
        %911 = vmatpush1.bf16.xpose.msra.mxu0 0
        %912 = vmatprep.subr.bf16.mxu0 0
        %913 = vmatpush1.bf16.xpose.msra.mxu0 0
        %914 = vmatprep.mubr.bf16.mxu0 0
        %915 = vmatmul.mubr.bf16.gmra.mrb[0].mxu0 %v877
        %v916 = vpop.f32.mrb[0].mxu0
        %v917 = vadd.f32 0.0, %v916
        %v918 = vpop.f32.mrb[0].mxu0
        %v919 = vpop.f32.mrb[0].mxu0
        %v920 = vpop.f32.mrb[0].mxu0
        %921 = vdwg.mxu0
        %v922 = vsel %vm806, %v917, -inf
        %923 = vmax.xlane.f32.xlu0 %v922
        %v924 = vpop.xlane.xlu0 %923
        %v925 = vsub.f32 %v917, %v924
        %v926 = vmul.f32 %v925, 1.442695
        %v927 = vpow.pop %v926
        %v928 = vsel %vm806, %v927, 0.0
        %929 = vadd.xlane.f32.xlu0 %v928
        %v930 = vpop.xlane.xlu0 %929
        %v931 = vrcp.pop %v930
        %v932 = vmul.f32 %v927, %v931
        %v933 = vpack.c.bf16 %v932, %v932
        %935 = vrot.lane.b32.xlu0 %v867, 120
        %v936 = vpop.permute.xlu0 %935
        %v939 = vsel %vm806, %v933, 0
        %941 = vmatprep.subr.bf16.mxu0 0
        %942 = vmatpush1.bf16.msra.mxu0 %v936
        %943 = vmatprep.subr.bf16.mxu0 0
        %944 = vmatpush1.bf16.msra.mxu0 0
        %945 = vmatprep.subr.bf16.mxu0 0
        %946 = vmatpush1.bf16.msra.mxu0 0
        %947 = vmatprep.subr.bf16.mxu0 0
        %948 = vmatpush1.bf16.msra.mxu0 0
        %949 = vmatprep.subr.bf16.mxu0 0
        %950 = vmatpush1.bf16.msra.mxu0 0
        %951 = vmatprep.subr.bf16.mxu0 0
        %952 = vmatpush1.bf16.msra.mxu0 0
        %953 = vmatprep.subr.bf16.mxu0 0
        %954 = vmatpush1.bf16.msra.mxu0 0
        %955 = vmatprep.subr.bf16.mxu0 0
        %956 = vmatpush1.bf16.msra.mxu0 0
        %957 = vmatprep.subr.bf16.mxu0 0
        %958 = vmatpush1.bf16.msra.mxu0 0
        %959 = vmatprep.subr.bf16.mxu0 0
        %960 = vmatpush1.bf16.msra.mxu0 0
        %961 = vmatprep.subr.bf16.mxu0 0
        %962 = vmatpush1.bf16.msra.mxu0 0
        %963 = vmatprep.subr.bf16.mxu0 0
        %964 = vmatpush1.bf16.msra.mxu0 0
        %965 = vmatprep.subr.bf16.mxu0 0
        %966 = vmatpush1.bf16.msra.mxu0 0
        %967 = vmatprep.subr.bf16.mxu0 0
        %968 = vmatpush1.bf16.msra.mxu0 0
        %969 = vmatprep.subr.bf16.mxu0 0
        %970 = vmatpush1.bf16.msra.mxu0 0
        %971 = vmatprep.subr.bf16.mxu0 0
        %972 = vmatpush1.bf16.msra.mxu0 0
        %973 = vmatprep.mubr.bf16.mxu0 0
        %974 = vmatmul.mubr.bf16.gmra.mrb[0].mxu0 %v939
        %v975 = vpop.f32.mrb[0].mxu0
        %v976 = vadd.f32 0.0, %v975
        %v977 = vpop.f32.mrb[0].mxu0
        %v978 = vpop.f32.mrb[0].mxu0
        %v979 = vpop.f32.mrb[0].mxu0
        %980 = vdwg.mxu0
        %v981 = vpack.c.bf16 %v976, %v976
        %v983 = vunpack.c.l.b16 %v981
        %v984 = vpack.c.b16 %v983, %v983
        %985 = vrot.lane.b32.xlu0 %v984, 8
        %v986 = vpop.permute.xlu0 %985
        %vm988 = vcmask 126016
        %989 = vst.msk [vmem:[#allocation5] sm:$0xf] %vm988, %v986
        %v990 = vld [vmem:[#allocation2] sm:$0xf]
        %v991 = vld [vmem:[#allocation3] sm:$0xff]
        %v992 = vld [vmem:[#allocation4] sm:$0xff]
        %v994 = vunpack.c.l.b16 %v990
        %v995 = vpack.c.b16 %v994, %v994
        %996 = vrot.lane.b32.xlu0 %v995, 112
        %v997 = vpop.permute.xlu0 %996
        %999 = vrot.lane.b32.xlu0 %v991, 112
        %v1000 = vpop.permute.xlu0 %999
        %v1002 = vsel %vm759, %v997, 0
        %v1005 = vsel %vm759, %v1000, 0
        %1007 = vmatprep.subr.bf16.mxu0 0
        %1008 = vmatpush1.bf16.xpose.msra.mxu0 %v1005
        %1009 = vmatprep.subr.bf16.mxu0 0
        %1010 = vmatpush1.bf16.xpose.msra.mxu0 0
        %1011 = vmatprep.subr.bf16.mxu0 0
        %1012 = vmatpush1.bf16.xpose.msra.mxu0 0
        %1013 = vmatprep.subr.bf16.mxu0 0
        %1014 = vmatpush1.bf16.xpose.msra.mxu0 0
        %1015 = vmatprep.subr.bf16.mxu0 0
        %1016 = vmatpush1.bf16.xpose.msra.mxu0 0
        %1017 = vmatprep.subr.bf16.mxu0 0
        %1018 = vmatpush1.bf16.xpose.msra.mxu0 0
        %1019 = vmatprep.subr.bf16.mxu0 0
        %1020 = vmatpush1.bf16.xpose.msra.mxu0 0
        %1021 = vmatprep.subr.bf16.mxu0 0
        %1022 = vmatpush1.bf16.xpose.msra.mxu0 0
        %1023 = vmatprep.subr.bf16.mxu0 0
        %1024 = vmatpush1.bf16.xpose.msra.mxu0 0
        %1025 = vmatprep.subr.bf16.mxu0 0
        %1026 = vmatpush1.bf16.xpose.msra.mxu0 0
        %1027 = vmatprep.subr.bf16.mxu0 0
        %1028 = vmatpush1.bf16.xpose.msra.mxu0 0
        %1029 = vmatprep.subr.bf16.mxu0 0
        %1030 = vmatpush1.bf16.xpose.msra.mxu0 0
        %1031 = vmatprep.subr.bf16.mxu0 0
        %1032 = vmatpush1.bf16.xpose.msra.mxu0 0
        %1033 = vmatprep.subr.bf16.mxu0 0
        %1034 = vmatpush1.bf16.xpose.msra.mxu0 0
        %1035 = vmatprep.subr.bf16.mxu0 0
        %1036 = vmatpush1.bf16.xpose.msra.mxu0 0
        %1037 = vmatprep.subr.bf16.mxu0 0
        %1038 = vmatpush1.bf16.xpose.msra.mxu0 0
        %1039 = vmatprep.mubr.bf16.mxu0 0
        %1040 = vmatmul.mubr.bf16.gmra.mrb[0].mxu0 %v1002
        %v1041 = vpop.f32.mrb[0].mxu0
        %v1042 = vadd.f32 0.0, %v1041
        %v1043 = vpop.f32.mrb[0].mxu0
        %v1044 = vpop.f32.mrb[0].mxu0
        %v1045 = vpop.f32.mrb[0].mxu0
        %1046 = vdwg.mxu0
        %v1047 = vsel %vm806, %v1042, -inf
        %1048 = vmax.xlane.f32.xlu0 %v1047
        %v1049 = vpop.xlane.xlu0 %1048
        %v1050 = vsub.f32 %v1042, %v1049
        %v1051 = vmul.f32 %v1050, 1.442695
        %v1052 = vpow.pop %v1051
        %v1053 = vsel %vm806, %v1052, 0.0
        %1054 = vadd.xlane.f32.xlu0 %v1053
        %v1055 = vpop.xlane.xlu0 %1054
        %v1056 = vrcp.pop %v1055
        %v1057 = vmul.f32 %v1052, %v1056
        %v1058 = vpack.c.bf16 %v1057, %v1057
        %1060 = vrot.lane.b32.xlu0 %v992, 112
        %v1061 = vpop.permute.xlu0 %1060
        %v1064 = vsel %vm806, %v1058, 0
        %1066 = vmatprep.subr.bf16.mxu0 0
        %1067 = vmatpush1.bf16.msra.mxu0 %v1061
        %1068 = vmatprep.subr.bf16.mxu0 0
        %1069 = vmatpush1.bf16.msra.mxu0 0
        %1070 = vmatprep.subr.bf16.mxu0 0
        %1071 = vmatpush1.bf16.msra.mxu0 0
        %1072 = vmatprep.subr.bf16.mxu0 0
        %1073 = vmatpush1.bf16.msra.mxu0 0
        %1074 = vmatprep.subr.bf16.mxu0 0
        %1075 = vmatpush1.bf16.msra.mxu0 0
        %1076 = vmatprep.subr.bf16.mxu0 0
        %1077 = vmatpush1.bf16.msra.mxu0 0
        %1078 = vmatprep.subr.bf16.mxu0 0
        %1079 = vmatpush1.bf16.msra.mxu0 0
        %1080 = vmatprep.subr.bf16.mxu0 0
        %1081 = vmatpush1.bf16.msra.mxu0 0
        %1082 = vmatprep.subr.bf16.mxu0 0
        %1083 = vmatpush1.bf16.msra.mxu0 0
        %1084 = vmatprep.subr.bf16.mxu0 0
        %1085 = vmatpush1.bf16.msra.mxu0 0
        %1086 = vmatprep.subr.bf16.mxu0 0
        %1087 = vmatpush1.bf16.msra.mxu0 0
        %1088 = vmatprep.subr.bf16.mxu0 0
        %1089 = vmatpush1.bf16.msra.mxu0 0
        %1090 = vmatprep.subr.bf16.mxu0 0
        %1091 = vmatpush1.bf16.msra.mxu0 0
        %1092 = vmatprep.subr.bf16.mxu0 0
        %1093 = vmatpush1.bf16.msra.mxu0 0
        %1094 = vmatprep.subr.bf16.mxu0 0
        %1095 = vmatpush1.bf16.msra.mxu0 0
        %1096 = vmatprep.subr.bf16.mxu0 0
        %1097 = vmatpush1.bf16.msra.mxu0 0
        %1098 = vmatprep.mubr.bf16.mxu0 0
        %1099 = vmatmul.mubr.bf16.gmra.mrb[0].mxu0 %v1064
        %v1100 = vpop.f32.mrb[0].mxu0
        %v1101 = vadd.f32 0.0, %v1100
        %v1102 = vpop.f32.mrb[0].mxu0
        %v1103 = vpop.f32.mrb[0].mxu0
        %v1104 = vpop.f32.mrb[0].mxu0
        %1105 = vdwg.mxu0
        %v1106 = vpack.c.bf16 %v1101, %v1101
        %v1108 = vunpack.c.l.b16 %v1106
        %v1109 = vpack.c.b16 %v1108, %v1108
        %1110 = vrot.lane.b32.xlu0 %v1109, 16
        %v1111 = vpop.permute.xlu0 %1110
        %vm1113 = vcmask 191616
        %1114 = vst.msk [vmem:[#allocation5] sm:$0xf] %vm1113, %v1111
        %v1115 = vld [vmem:[#allocation2] sm:$0xf]
        %v1116 = vld [vmem:[#allocation3] sm:$0xff]
        %v1117 = vld [vmem:[#allocation4] sm:$0xff]
        %v1119 = vunpack.c.l.b16 %v1115
        %v1120 = vpack.c.b16 %v1119, %v1119
        %1121 = vrot.lane.b32.xlu0 %v1120, 104
        %v1122 = vpop.permute.xlu0 %1121
        %1124 = vrot.lane.b32.xlu0 %v1116, 104
        %v1125 = vpop.permute.xlu0 %1124
        %v1127 = vsel %vm759, %v1122, 0
        %v1130 = vsel %vm759, %v1125, 0
        %1132 = vmatprep.subr.bf16.mxu0 0
        %1133 = vmatpush1.bf16.xpose.msra.mxu0 %v1130
        %1134 = vmatprep.subr.bf16.mxu0 0
        %1135 = vmatpush1.bf16.xpose.msra.mxu0 0
        %1136 = vmatprep.subr.bf16.mxu0 0
        %1137 = vmatpush1.bf16.xpose.msra.mxu0 0
        %1138 = vmatprep.subr.bf16.mxu0 0
        %1139 = vmatpush1.bf16.xpose.msra.mxu0 0
        %1140 = vmatprep.subr.bf16.mxu0 0
        %1141 = vmatpush1.bf16.xpose.msra.mxu0 0
        %1142 = vmatprep.subr.bf16.mxu0 0
        %1143 = vmatpush1.bf16.xpose.msra.mxu0 0
        %1144 = vmatprep.subr.bf16.mxu0 0
        %1145 = vmatpush1.bf16.xpose.msra.mxu0 0
        %1146 = vmatprep.subr.bf16.mxu0 0
        %1147 = vmatpush1.bf16.xpose.msra.mxu0 0
        %1148 = vmatprep.subr.bf16.mxu0 0
        %1149 = vmatpush1.bf16.xpose.msra.mxu0 0
        %1150 = vmatprep.subr.bf16.mxu0 0
        %1151 = vmatpush1.bf16.xpose.msra.mxu0 0
        %1152 = vmatprep.subr.bf16.mxu0 0
        %1153 = vmatpush1.bf16.xpose.msra.mxu0 0
        %1154 = vmatprep.subr.bf16.mxu0 0
        %1155 = vmatpush1.bf16.xpose.msra.mxu0 0
        %1156 = vmatprep.subr.bf16.mxu0 0
        %1157 = vmatpush1.bf16.xpose.msra.mxu0 0
        %1158 = vmatprep.subr.bf16.mxu0 0
        %1159 = vmatpush1.bf16.xpose.msra.mxu0 0
        %1160 = vmatprep.subr.bf16.mxu0 0
        %1161 = vmatpush1.bf16.xpose.msra.mxu0 0
        %1162 = vmatprep.subr.bf16.mxu0 0
        %1163 = vmatpush1.bf16.xpose.msra.mxu0 0
        %1164 = vmatprep.mubr.bf16.mxu0 0
        %1165 = vmatmul.mubr.bf16.gmra.mrb[0].mxu0 %v1127
        %v1166 = vpop.f32.mrb[0].mxu0
        %v1167 = vadd.f32 0.0, %v1166
        %v1168 = vpop.f32.mrb[0].mxu0
        %v1169 = vpop.f32.mrb[0].mxu0
        %v1170 = vpop.f32.mrb[0].mxu0
        %1171 = vdwg.mxu0
        %v1172 = vsel %vm806, %v1167, -inf
        %1173 = vmax.xlane.f32.xlu0 %v1172
        %v1174 = vpop.xlane.xlu0 %1173
        %v1175 = vsub.f32 %v1167, %v1174
        %v1176 = vmul.f32 %v1175, 1.442695
        %v1177 = vpow.pop %v1176
        %v1178 = vsel %vm806, %v1177, 0.0
        %1179 = vadd.xlane.f32.xlu0 %v1178
        %v1180 = vpop.xlane.xlu0 %1179
        %v1181 = vrcp.pop %v1180
        %v1182 = vmul.f32 %v1177, %v1181
        %v1183 = vpack.c.bf16 %v1182, %v1182
        %1185 = vrot.lane.b32.xlu0 %v1117, 104
        %v1186 = vpop.permute.xlu0 %1185
        %v1189 = vsel %vm806, %v1183, 0
        %1191 = vmatprep.subr.bf16.mxu0 0
        %1192 = vmatpush1.bf16.msra.mxu0 %v1186
        %1193 = vmatprep.subr.bf16.mxu0 0
        %1194 = vmatpush1.bf16.msra.mxu0 0
        %1195 = vmatprep.subr.bf16.mxu0 0
        %1196 = vmatpush1.bf16.msra.mxu0 0
        %1197 = vmatprep.subr.bf16.mxu0 0
        %1198 = vmatpush1.bf16.msra.mxu0 0
        %1199 = vmatprep.subr.bf16.mxu0 0
        %1200 = vmatpush1.bf16.msra.mxu0 0
        %1201 = vmatprep.subr.bf16.mxu0 0
        %1202 = vmatpush1.bf16.msra.mxu0 0
        %1203 = vmatprep.subr.bf16.mxu0 0
        %1204 = vmatpush1.bf16.msra.mxu0 0
        %1205 = vmatprep.subr.bf16.mxu0 0
        %1206 = vmatpush1.bf16.msra.mxu0 0
        %1207 = vmatprep.subr.bf16.mxu0 0
        %1208 = vmatpush1.bf16.msra.mxu0 0
        %1209 = vmatprep.subr.bf16.mxu0 0
        %1210 = vmatpush1.bf16.msra.mxu0 0
        %1211 = vmatprep.subr.bf16.mxu0 0
        %1212 = vmatpush1.bf16.msra.mxu0 0
        %1213 = vmatprep.subr.bf16.mxu0 0
        %1214 = vmatpush1.bf16.msra.mxu0 0
        %1215 = vmatprep.subr.bf16.mxu0 0
        %1216 = vmatpush1.bf16.msra.mxu0 0
        %1217 = vmatprep.subr.bf16.mxu0 0
        %1218 = vmatpush1.bf16.msra.mxu0 0
        %1219 = vmatprep.subr.bf16.mxu0 0
        %1220 = vmatpush1.bf16.msra.mxu0 0
        %1221 = vmatprep.subr.bf16.mxu0 0
        %1222 = vmatpush1.bf16.msra.mxu0 0
        %1223 = vmatprep.mubr.bf16.mxu0 0
        %1224 = vmatmul.mubr.bf16.gmra.mrb[0].mxu0 %v1189
        %v1225 = vpop.f32.mrb[0].mxu0
        %v1226 = vadd.f32 0.0, %v1225
        %v1227 = vpop.f32.mrb[0].mxu0
        %v1228 = vpop.f32.mrb[0].mxu0
        %v1229 = vpop.f32.mrb[0].mxu0
        %1230 = vdwg.mxu0
        %v1231 = vpack.c.bf16 %v1226, %v1226
        %v1233 = vunpack.c.l.b16 %v1231
        %v1234 = vpack.c.b16 %v1233, %v1233
        %1235 = vrot.lane.b32.xlu0 %v1234, 24
        %v1236 = vpop.permute.xlu0 %1235
        %vm1238 = vcmask 257216
        %1239 = vst.msk [vmem:[#allocation5] sm:$0xf] %vm1238, %v1236
        %v1240 = vld [vmem:[#allocation5] sm:$0xf]
        %v1241 = vld [vmem:[%s9] sm:$0xf]
        %v1242 = vld [vmem:[%s9 + $0x4] sm:$0xf]
        %v1243 = vld [vmem:[%s9 + $0x8] sm:$0xf]
        %v1244 = vld [vmem:[%s9 + $0xc] sm:$0xf]
        %v1245 = vld [vmem:[%s10] sm:$0x1]
        %v1247 = vlaneseq
        %v1248 = vshrl.u32 %v1247, 7
        %v1249 = vsub.s32 0, %v1248
        %v1250 = vrot.slane %v1245, %v1249
        %v1256 = vunpack.c.l.b16 %v1241
        %v1257 = vunpack.c.l.b16 %v1242
        %v1258 = vunpack.c.l.b16 %v1243
        %v1259 = vunpack.c.l.b16 %v1244
        %v1260 = vpack.c.b16 %v1257, %v1256
        %v1261 = vpack.c.b16 %v1259, %v1258
        %v1265 = vsel %vm570, %v1240, 0
        %1267 = vmatprep.subr.bf16.mxu0 0
        %1268 = vmatpush1.bf16.msra.mxu0 %v1260
        %1269 = vmatprep.subr.bf16.mxu0 0
        %1270 = vmatpush1.bf16.msra.mxu0 %v1261
        %1271 = vmatprep.subr.bf16.mxu0 0
        %1272 = vmatpush1.bf16.msra.mxu0 0
        %1273 = vmatprep.subr.bf16.mxu0 0
        %1274 = vmatpush1.bf16.msra.mxu0 0
        %1275 = vmatprep.subr.bf16.mxu0 0
        %1276 = vmatpush1.bf16.msra.mxu0 0
        %1277 = vmatprep.subr.bf16.mxu0 0
        %1278 = vmatpush1.bf16.msra.mxu0 0
        %1279 = vmatprep.subr.bf16.mxu0 0
        %1280 = vmatpush1.bf16.msra.mxu0 0
        %1281 = vmatprep.subr.bf16.mxu0 0
        %1282 = vmatpush1.bf16.msra.mxu0 0
        %1283 = vmatprep.subr.bf16.mxu0 0
        %1284 = vmatpush1.bf16.msra.mxu0 0
        %1285 = vmatprep.subr.bf16.mxu0 0
        %1286 = vmatpush1.bf16.msra.mxu0 0
        %1287 = vmatprep.subr.bf16.mxu0 0
        %1288 = vmatpush1.bf16.msra.mxu0 0
        %1289 = vmatprep.subr.bf16.mxu0 0
        %1290 = vmatpush1.bf16.msra.mxu0 0
        %1291 = vmatprep.subr.bf16.mxu0 0
        %1292 = vmatpush1.bf16.msra.mxu0 0
        %1293 = vmatprep.subr.bf16.mxu0 0
        %1294 = vmatpush1.bf16.msra.mxu0 0
        %1295 = vmatprep.subr.bf16.mxu0 0
        %1296 = vmatpush1.bf16.msra.mxu0 0
        %1297 = vmatprep.subr.bf16.mxu0 0
        %1298 = vmatpush1.bf16.msra.mxu0 0
        %1299 = vmatprep.mubr.bf16.mxu0 0
        %1300 = vmatmul.mubr.bf16.gmra.mrb[0].mxu0 %v1265
        %v1301 = vpop.f32.mrb[0].mxu0
        %v1302 = vadd.f32 %v1250, %v1301
        %v1303 = vpop.f32.mrb[0].mxu0
        %v1304 = vpop.f32.mrb[0].mxu0
        %v1305 = vpop.f32.mrb[0].mxu0
        %1306 = vdwg.mxu0
        %1307 = vst.msk [vmem:[%s537] sm:$0xff] %vm570, %v1302
        %s1308 = sand.u32 %s303, 1
        %s1309 = scalar_lea.sflag [#allocation8], %s1308
        %s1310 = sand.u32 %s303, 1
        %s1311 = smul.addr %s1310, 8
        %s1312 = scalar_lea.vmem [#allocation17], %s1311
        // Predicated region
        $region89: #{tpu_custom_call.1} parent=63 // pred_check
          %p1313 = pneg %p313
        $region90: #{tpu_custom_call.1} parent=63 // pred_check_branch
          %1315 = sbr.rel (%p1313) target = $region92
        $region91: #{tpu_custom_call.1} parent=63 // pred_region
          %s1317 = ssub.s32 128, 128
          %1318 = vsyncadd %s1309, %s1317
          %s1319 = sadd.s32 %s38, %s37
          %s1320 = smul.addr %s1319, 128
          %s1321 = scalar_lea.hbm %s11, %s1320
          %s1323 = sshll.u32 %s1312, 4
          %s1324 = int_to_ptr.vmem [resolvable:$true] %s1323
          %1326 = dma.vmem_to_hbm [thread:$0]  %s1324, 128, %s1321, %s1309
        $region92: #{tpu_custom_call.1} parent=63 // pred_fallthru
          _
      $region64: #{tpu_custom_call.1} parent=5 // pred_fallthru
        _
      %p1327 = scmp.le.s32.totalorder 2, %s28
      // Predicated region
      $region93: #{tpu_custom_call.1} parent=5 // pred_check
        %p1328 = pneg %p1327
      $region94: #{tpu_custom_call.1} parent=5 // pred_check_branch
        %1330 = sbr.rel (%p1328) target = $region96
      $region95: #{tpu_custom_call.1} parent=5 // pred_region
        %s1331 = ssub.s32 %s28, 2
        // Predicated region
        $region97: #{tpu_custom_call.1} parent=95 // pred_check
          %p1332 = pneg %p319
        $region98: #{tpu_custom_call.1} parent=95 // pred_check_branch
          %1334 = sbr.rel (%p1332) target = $region100
        $region99: #{tpu_custom_call.1} parent=95 // pred_region
          %s1335 = sand.u32 %s304, 1
          %s1336 = scalar_lea.sflag [#allocation8], %s1335
          %s1337 = sand.u32 %s304, 1
          %s1338 = smul.addr %s1337, 8
          %s1339 = scalar_lea.vmem [#allocation17], %s1338
          %1340 = dma.done %s1336, 128
        $region100: #{tpu_custom_call.1} parent=95 // pred_fallthru
          _
      $region96: #{tpu_custom_call.1} parent=5 // pred_fallthru
        _
    $region6: #{tpu_custom_call.1} parent=1 // loop_footer
      %s32 = sadd.s32 1, %s28
    $region7: #{tpu_custom_call.1} parent=1 // loop_footer_branch
      %27 = sbr.rel target = $region3
    $region8: #{tpu_custom_call.1} parent=1 // loop_exit
      _
    %1341 = vsyncpa [#allocation7], 1
    %s1342 = scalar_lea.sflag [#allocation7], 1
    %1343 = vsyncpa %s1342, 1
    %1344 = vsyncpa [#allocation10], 1
    %s1345 = scalar_lea.sflag [#allocation10], 1
    %1346 = vsyncpa %s1345, 1
    %1347 = vsyncpa [#allocation13], 1
    %1348 = vsyncpa [#allocation16], 1
    %1349 = vsyncpa [#allocation8], 1
    %s1350 = scalar_lea.sflag [#allocation8], 1
    %1351 = vsyncpa %s1350, 1

</llo_original>
